<compile_context>
chip_gen: v6e
topology: v6e:2x2x1
jax: 0.10.0
libtpu: 0.0.40
codegen_flags: <defaults>
</compile_context>

<pallas_src>
import jax
import jax.numpy as jnp
from jax import lax
from jax.experimental import pallas as pl
from jax.experimental.pallas import tpu as pltpu


_LANE = 128        # lane width (last dim)
_SUBLANE = 8       # f32 sublane width
_BF16_SUBLANE = 16  # bf16 sublane packing (second-to-last dim granularity)
_FORI_THRESHOLD = 8  # use lax.fori_loop for this many blocks or more


def _round_up(v, m):
    return ((v + m - 1) // m) * m


def _pad_to(a, shape):
    pads = [(0, s - d) for d, s in zip(a.shape, shape)]
    return jnp.pad(a, pads)


# ------------------------------ fused kernel --------------------------------

def _fused_resnet_kernel(x_ref, fw_ref, fb_ref,
                         w1_ref, b1_ref, w2_ref, b2_ref,
                         hs_ref, ht_ref, hw_ref, hb_ref, o_ref):
    n_blocks = w1_ref.shape[0]

    # First Linear: bf16 operands on the MXU, f32 accumulate.
    x = jnp.dot(x_ref[...], fw_ref[...],
                preferred_element_type=jnp.float32) + fb_ref[...]

    # One ResNet block. BatchNorm is pre-folded into w1/b1; Dropout = identity.
    def block(blk, x):
        h = jnp.dot(x.astype(jnp.bfloat16), w1_ref[blk],
                    preferred_element_type=jnp.float32) + b1_ref[blk]
        h = jnp.maximum(h, 0.0)                                  # ReLU
        h = jnp.dot(h.astype(jnp.bfloat16), w2_ref[blk],
                    preferred_element_type=jnp.float32) + b2_ref[blk]
        return x + h                                             # skip (f32)

    if n_blocks >= _FORI_THRESHOLD:
        # Deep nets: bound live ranges / code size with a rolled loop and
        # dynamic leading-axis indexing of the stacked weights.
        x = lax.fori_loop(0, n_blocks, block, x)
    else:
        for blk in range(n_blocks):                              # static unroll
            x = block(blk, x)

    # Head: BatchNorm1d -> ReLU -> Linear (BN not foldable past the ReLU).
    h = jnp.maximum(x * hs_ref[...] + ht_ref[...], 0.0)
    o_ref[...] = (jnp.dot(h.astype(jnp.bfloat16), hw_ref[...],
                          preferred_element_type=jnp.float32) + hb_ref[...])


# ------------------------------ call wrapper ---------------------------------

def _vmem_cap_bytes():
    """Generation-aware VMEM cap, ~7/8 of physical to leave compiler headroom."""
    cap = 64 << 20  # conservative default (v7x per-TC VMEM)
    try:
        info = pltpu.get_tpu_info()
        cap = int(getattr(info, "vmem_capacity_bytes", cap))
    except Exception:
        pass
    return max(cap - cap // 8, 32 << 20)


def _vmem_limit_bytes(tile_b, d_in_p, d_main_p, d_hidden_p, d_out_p,
                      n_blocks, weight_bufs):
    # bf16 weights
    w_bytes = 2 * (d_in_p * d_main_p
                   + n_blocks * 2 * d_main_p * d_hidden_p
                   + d_main_p * d_out_p)
    # f32 bias / BN vectors; each (1, d) row occupies a full (8, d) VMEM tile.
    v_bytes = 4 * _SUBLANE * (d_main_p
                              + n_blocks * (d_hidden_p + d_main_p)
                              + 2 * d_main_p + d_out_p)
    io_bytes = tile_b * (2 * d_in_p + 4 * d_out_p)               # bf16 in, f32 out
    act_bytes = 4 * tile_b * (3 * d_main_p + 2 * d_hidden_p)     # f32 temporaries
    need = weight_bufs * (w_bytes + v_bytes) + 2 * io_bytes + act_bytes
    return int(min(max(need + (8 << 20), 32 << 20), _vmem_cap_bytes()))


def _choose_batch_tiling(B):
    """Pick (tile_b, padded_batch).

    >=2 tiles when the batch allows it (so the "parallel" axis can shard over
    v7x's two TensorCores) with 16-row granularity (bf16 input packing) and a
    256-row cap; small batches use a single full-extent tile.
    TODO(synk): sweep tile_b up to 512 on v5e/v6e (128 MiB VMEM).
    """
    if B <= 16:
        b_pad = _round_up(B, _SUBLANE)
        return b_pad, b_pad
    n_tiles = max(2, pl.cdiv(B, 256))
    tile_b = min(256, _round_up(pl.cdiv(B, n_tiles), _BF16_SUBLANE))
    b_pad = _round_up(B, tile_b)
    return tile_b, b_pad


def _resnet_call(packed, x_pad, tile_b, single_buffer_weights):
    n_blocks = packed["n_blocks"]
    d_in_p, d_main_p = packed["first_w"].shape
    d_hidden_p = packed["w1"].shape[2]
    d_out_p = packed["head_w"].shape[1]
    b_pad = x_pad.shape[0]
    grid = (b_pad // tile_b,)

    batch_map = lambda i: (i, 0)
    const2 = lambda i: (0, 0)
    const3 = lambda i: (0, 0, 0)

    use_buffered = single_buffer_weights and hasattr(pl, "Buffered")
    if use_buffered:
        # Constant-index blocks are fetched once; single-buffer them so the
        # weight set occupies 1x (not 2x) VMEM.
        wspec2 = lambda s: pl.BlockSpec(s, const2, pipeline_mode=pl.Buffered(1))
        wspec3 = lambda s: pl.BlockSpec(s, const3, pipeline_mode=pl.Buffered(1))
        weight_bufs = 1
    else:
        wspec2 = lambda s: pl.BlockSpec(s, const2)
        wspec3 = lambda s: pl.BlockSpec(s, const3)
        weight_bufs = 2

    in_specs = [
        pl.BlockSpec((tile_b, d_in_p), batch_map),               # x (bf16)
        wspec2((d_in_p, d_main_p)),                              # first_w
        wspec2((1, d_main_p)),                                   # first_b
        wspec3((n_blocks, d_main_p, d_hidden_p)),                # w1 (BN folded)
        wspec3((n_blocks, 1, d_hidden_p)),                       # b1 (BN folded)
        wspec3((n_blocks, d_hidden_p, d_main_p)),                # w2
        wspec3((n_blocks, 1, d_main_p)),                         # b2
        wspec2((1, d_main_p)),                                   # head_scale
        wspec2((1, d_main_p)),                                   # head_shift
        wspec2((d_main_p, d_out_p)),                             # head_w
        wspec2((1, d_out_p)),                                    # head_b
    ]
    out_specs = pl.BlockSpec((tile_b, d_out_p), batch_map)

    flops = 2 * b_pad * (d_in_p * d_main_p
                         + n_blocks * 2 * d_main_p * d_hidden_p
                         + d_main_p * d_out_p)
    bytes_accessed = (2 * (d_in_p * d_main_p
                           + n_blocks * 2 * d_main_p * d_hidden_p
                           + d_main_p * d_out_p)
                      + 2 * b_pad * d_in_p + 4 * b_pad * d_out_p)

    return pl.pallas_call(
        _fused_resnet_kernel,
        out_shape=jax.ShapeDtypeStruct((b_pad, d_out_p), jnp.float32),
        grid=grid,
        in_specs=in_specs,
        out_specs=out_specs,
        compiler_params=pltpu.CompilerParams(
            dimension_semantics=("parallel",),
            vmem_limit_bytes=_vmem_limit_bytes(
                tile_b, d_in_p, d_main_p, d_hidden_p, d_out_p,
                n_blocks, weight_bufs)),
        cost_estimate=pl.CostEstimate(flops=flops, transcendentals=0,
                                      bytes_accessed=bytes_accessed),
    )(x_pad, packed["first_w"], packed["first_b"],
      packed["w1"], packed["b1"], packed["w2"], packed["b2"],
      packed["head_scale"], packed["head_shift"],
      packed["head_w"], packed["head_b"])


def resnet_forward(packed, x):
    """Fused Pallas forward pass. `packed` comes from pack_resnet_params."""
    d_out = packed["d_out"]
    d_in_p = packed["first_w"].shape[0]

    B = x.shape[0]
    tile_b, b_pad = _choose_batch_tiling(B)
    # bf16 input: halves the x HBM->VMEM bytes; numerically identical to the
    # previous in-kernel cast before the first (bf16) matmul.
    x_pad = _pad_to(x.astype(jnp.float32), (b_pad, d_in_p)).astype(jnp.bfloat16)

    try:
        out = _resnet_call(packed, x_pad, tile_b, single_buffer_weights=True)
    except Exception:
        # Fallback for JAX versions without BlockSpec pipeline_mode support.
        out = _resnet_call(packed, x_pad, tile_b, single_buffer_weights=False)
    return out[:B, :d_out]


# ------------------------------ parameter init ------------------------------

def _linear_params(key, d_in, d_out):
    """PyTorch-style nn.Linear init; weight pre-transposed as (d_in, d_out)."""
    kw, kb = jax.random.split(key)
    bound = 1.0 / jnp.sqrt(d_in)
    w = jax.random.uniform(kw, (d_in, d_out), jnp.float32, -bound, bound)
    b = jax.random.uniform(kb, (1, d_out), jnp.float32, -bound, bound)
    return w, b


def _bn_params(key, d, eps=1e-5):
    """Deterministic (non-trivial) BatchNorm1d eval-mode scale/shift."""
    k1, k2, k3, k4 = jax.random.split(key, 4)
    gamma = 1.0 + 0.1 * jax.random.normal(k1, (1, d), jnp.float32)
    beta = 0.1 * jax.random.normal(k2, (1, d), jnp.float32)
    running_mean = 0.1 * jax.random.normal(k3, (1, d), jnp.float32)
    running_var = 1.0 + 0.1 * jax.random.uniform(k4, (1, d), jnp.float32)
    scale = gamma / jnp.sqrt(running_var + eps)
    shift = beta - running_mean * scale
    return scale, shift


def init_resnet_params(key, *, d_in, n_blocks, d_main, d_hidden, d_out):
    keys = jax.random.split(key, 2 + 3 * n_blocks + 2)
    ki = iter(range(len(keys)))
    params = {}
    params["first_w"], params["first_b"] = _linear_params(keys[next(ki)], d_in, d_main)
    blocks = []
    for _ in range(n_blocks):
        bn_scale, bn_shift = _bn_params(keys[next(ki)], d_main)
        w1, b1 = _linear_params(keys[next(ki)], d_main, d_hidden)
        w2, b2 = _linear_params(keys[next(ki)], d_hidden, d_main)
        blocks.append(dict(bn_scale=bn_scale, bn_shift=bn_shift,
                           w1=w1, b1=b1, w2=w2, b2=b2))
    params["blocks"] = blocks
    params["head_scale"], params["head_shift"] = _bn_params(keys[next(ki)], d_main)
    params["head_w"], params["head_b"] = _linear_params(keys[next(ki)], d_main, d_out)
    return params


def pack_resnet_params(params):
    """Fold block BN into w1/b1, zero-pad feature dims to 128 multiples, stack
    block params, store weights in bf16.

    Zero padding keeps the math exact: padded input columns/weight rows and
    padded bias/scale/shift entries are all zero, so padded lanes stay zero
    through every block and are sliced off the final output.
    """
    blocks = params["blocks"]
    n_blocks = len(blocks)
    assert n_blocks >= 1, "pack_resnet_params requires at least one block"
    d_in, d_main = params["first_w"].shape
    d_hidden = blocks[0]["w1"].shape[1]
    d_out = params["head_w"].shape[1]

    d_in_p = _round_up(d_in, _LANE)
    d_main_p = _round_up(d_main, _LANE)
    d_hidden_p = _round_up(d_hidden, _LANE)
    d_out_p = _round_up(d_out, _LANE)

    w1s, b1s, w2s, b2s = [], [], [], []
    for blk in blocks:
        # Fold eval-mode BatchNorm into the first linear of the block:
        #   (x*s + t) @ W1 + b1 == x @ (s.T * W1) + (t @ W1 + b1)
        w1_eff = blk["w1"] * blk["bn_scale"].T                 # (d_main, d_hidden)
        b1_eff = blk["bn_shift"] @ blk["w1"] + blk["b1"]       # (1, d_hidden)
        w1s.append(_pad_to(w1_eff, (d_main_p, d_hidden_p)))
        b1s.append(_pad_to(b1_eff, (1, d_hidden_p)))
        w2s.append(_pad_to(blk["w2"], (d_hidden_p, d_main_p)))
        b2s.append(_pad_to(blk["b2"], (1, d_main_p)))

    return dict(
        d_in=d_in, d_main=d_main, d_hidden=d_hidden, d_out=d_out,
        n_blocks=n_blocks,
        first_w=_pad_to(params["first_w"], (d_in_p, d_main_p)).astype(jnp.bfloat16),
        first_b=_pad_to(params["first_b"], (1, d_main_p)),
        w1=jnp.stack(w1s).astype(jnp.bfloat16),
        b1=jnp.stack(b1s),
        w2=jnp.stack(w2s).astype(jnp.bfloat16),
        b2=jnp.stack(b2s),
        head_scale=_pad_to(params["head_scale"], (1, d_main_p)),
        head_shift=_pad_to(params["head_shift"], (1, d_main_p)),
        head_w=_pad_to(params["head_w"], (d_main_p, d_out_p)).astype(jnp.bfloat16),
        head_b=_pad_to(params["head_b"], (1, d_out_p)),
    )


# Pure-JAX f32 reference (same eval-mode semantics, un-folded BN).
def resnet_forward_ref(params, x):
    x = x @ params["first_w"] + params["first_b"]
    for blk in params["blocks"]:
        h = x * blk["bn_scale"] + blk["bn_shift"]
        h = jnp.maximum(h @ blk["w1"] + blk["b1"], 0.0)
        h = h @ blk["w2"] + blk["b2"]
        x = x + h
    h = jnp.maximum(x * params["head_scale"] + params["head_shift"], 0.0)
    return h @ params["head_w"] + params["head_b"]


# ----------------------------------- main ------------------------------------

if __name__ == "__main__":
    key = jax.random.PRNGKey(0)
    kx, kp, kx2, kp2 = jax.random.split(key, 4)

    # Test 1: small tabular-ish config -> static block unroll, single batch tile.
    B, D_IN, D_MAIN, D_HIDDEN, D_OUT, N_BLOCKS = 8, 16, 32, 64, 4, 2
    x = jax.random.normal(kx, (B, D_IN), jnp.float32)
    params = init_resnet_params(kp, d_in=D_IN, n_blocks=N_BLOCKS,
                                d_main=D_MAIN, d_hidden=D_HIDDEN, d_out=D_OUT)
    packed = pack_resnet_params(params)
    out = jax.block_until_ready(resnet_forward(packed, x))
    ref = resnet_forward_ref(params, x)
    assert out.shape == (B, D_OUT)
    # bf16 matmul operands (f32 accumulate) -> loosened tolerance vs f32 reference.
    assert jnp.allclose(out, ref, atol=3e-2, rtol=3e-2), "mismatch vs reference (small)"

    # Test 2: exercises the fori_loop block path and a multi-tile (megacore) grid.
    B2, N_BLOCKS2 = 40, 9
    x2 = jax.random.normal(kx2, (B2, D_IN), jnp.float32)
    params2 = init_resnet_params(kp2, d_in=D_IN, n_blocks=N_BLOCKS2,
                                 d_main=D_MAIN, d_hidden=D_HIDDEN, d_out=D_OUT)
    packed2 = pack_resnet_params(params2)
    out2 = jax.block_until_ready(resnet_forward(packed2, x2))
    ref2 = resnet_forward_ref(params2, x2)
    assert out2.shape == (B2, D_OUT)
    assert jnp.allclose(out2, ref2, atol=5e-2, rtol=5e-2), "mismatch vs reference (deep)"

    print("KERNEL_OK")
</pallas_src>

<mosaic_0001>
module attributes {stable_mosaic.version = 11 : i64} {
  func.func @_fused_resnet_kernel(%arg0: i32, %arg1: memref<8x128xbf16, #tpu.memory_space<vmem>>, %arg2: memref<128x128xbf16, #tpu.memory_space<vmem>>, %arg3: memref<1x128xf32, #tpu.memory_space<vmem>>, %arg4: memref<2x128x128xbf16, #tpu.memory_space<vmem>>, %arg5: memref<2x1x128xf32, #tpu.memory_space<vmem>>, %arg6: memref<2x128x128xbf16, #tpu.memory_space<vmem>>, %arg7: memref<2x1x128xf32, #tpu.memory_space<vmem>>, %arg8: memref<1x128xf32, #tpu.memory_space<vmem>>, %arg9: memref<1x128xf32, #tpu.memory_space<vmem>>, %arg10: memref<128x128xbf16, #tpu.memory_space<vmem>>, %arg11: memref<1x128xf32, #tpu.memory_space<vmem>>, %arg12: memref<8x128xf32, #tpu.memory_space<vmem>>) attributes {dimension_semantics = [#tpu.dimension_semantics<parallel>], iteration_bounds = array<i64: 1>, scalar_prefetch = 0 : i64, scratch_operands = 0 : i64, tpu.core_type = #tpu.core_type<tc>, window_params = [{transform_indices = @transform_0, window_bounds = array<i64: 8, 128>}, {pipeline_mode = #tpu.pipeline_mode<synchronous>, transform_indices = @transform_1, window_bounds = array<i64: 128, 128>}, {pipeline_mode = #tpu.pipeline_mode<synchronous>, transform_indices = @transform_2, window_bounds = array<i64: 1, 128>}, {pipeline_mode = #tpu.pipeline_mode<synchronous>, transform_indices = @transform_3, window_bounds = array<i64: 2, 128, 128>}, {pipeline_mode = #tpu.pipeline_mode<synchronous>, transform_indices = @transform_4, window_bounds = array<i64: 2, 1, 128>}, {pipeline_mode = #tpu.pipeline_mode<synchronous>, transform_indices = @transform_5, window_bounds = array<i64: 2, 128, 128>}, {pipeline_mode = #tpu.pipeline_mode<synchronous>, transform_indices = @transform_6, window_bounds = array<i64: 2, 1, 128>}, {pipeline_mode = #tpu.pipeline_mode<synchronous>, transform_indices = @transform_7, window_bounds = array<i64: 1, 128>}, {pipeline_mode = #tpu.pipeline_mode<synchronous>, transform_indices = @transform_8, window_bounds = array<i64: 1, 128>}, {pipeline_mode = #tpu.pipeline_mode<synchronous>, transform_indices = @transform_9, window_bounds = array<i64: 128, 128>}, {pipeline_mode = #tpu.pipeline_mode<synchronous>, transform_indices = @transform_10, window_bounds = array<i64: 1, 128>}, {transform_indices = @transform_11, window_bounds = array<i64: 8, 128>}]} {
    %c0 = arith.constant 0 : index
    %c0_0 = arith.constant 0 : index
    %0 = vector.load %arg1[%c0, %c0_0] : memref<8x128xbf16, #tpu.memory_space<vmem>>, vector<8x128xbf16>
    %c0_1 = arith.constant 0 : index
    %c0_2 = arith.constant 0 : index
    %1 = vector.load %arg2[%c0_1, %c0_2] : memref<128x128xbf16, #tpu.memory_space<vmem>>, vector<128x128xbf16>
    %cst = arith.constant dense<0.000000e+00> : vector<8x128xf32>
    %2 = tpu.matmul %0, %1, %cst {dimension_numbers = #tpu.dot_dimension_numbers<[1], [0], [0], [1], [0, 0, 1, 1], [], []>} : vector<8x128xbf16>, vector<128x128xbf16>, vector<8x128xf32> -> vector<8x128xf32>
    %c0_3 = arith.constant 0 : index
    %c0_4 = arith.constant 0 : index
    %3 = vector.load %arg3[%c0_3, %c0_4] : memref<1x128xf32, #tpu.memory_space<vmem>>, vector<1x128xf32>
    %4 = vector.broadcast %3 : vector<1x128xf32> to vector<8x128xf32>
    %5 = arith.addf %2, %4 : vector<8x128xf32>
    %6 = arith.truncf %5 : vector<8x128xf32> to vector<8x128xbf16>
    %c0_5 = arith.constant 0 : index
    %c0_6 = arith.constant 0 : index
    %c0_7 = arith.constant 0 : index
    %7 = vector.load %arg4[%c0_5, %c0_6, %c0_7] : memref<2x128x128xbf16, #tpu.memory_space<vmem>>, vector<1x128x128xbf16>
    %8 = vector.shape_cast %7 : vector<1x128x128xbf16> to vector<128x128xbf16>
    %cst_8 = arith.constant dense<0.000000e+00> : vector<8x128xf32>
    %9 = tpu.matmul %6, %8, %cst_8 {dimension_numbers = #tpu.dot_dimension_numbers<[1], [0], [0], [1], [0, 0, 1, 1], [], []>} : vector<8x128xbf16>, vector<128x128xbf16>, vector<8x128xf32> -> vector<8x128xf32>
    %c0_9 = arith.constant 0 : index
    %c0_10 = arith.constant 0 : index
    %c0_11 = arith.constant 0 : index
    %10 = vector.load %arg5[%c0_9, %c0_10, %c0_11] : memref<2x1x128xf32, #tpu.memory_space<vmem>>, vector<1x1x128xf32>
    %11 = vector.shape_cast %10 : vector<1x1x128xf32> to vector<1x128xf32>
    %12 = vector.broadcast %11 : vector<1x128xf32> to vector<8x128xf32>
    %13 = arith.addf %9, %12 : vector<8x128xf32>
    %cst_12 = arith.constant 0.000000e+00 : f32
    %14 = vector.broadcast %cst_12 : f32 to vector<8x128xf32>
    %15 = arith.maximumf %13, %14 : vector<8x128xf32>
    %16 = arith.truncf %15 : vector<8x128xf32> to vector<8x128xbf16>
    %c0_13 = arith.constant 0 : index
    %c0_14 = arith.constant 0 : index
    %c0_15 = arith.constant 0 : index
    %17 = vector.load %arg6[%c0_13, %c0_14, %c0_15] : memref<2x128x128xbf16, #tpu.memory_space<vmem>>, vector<1x128x128xbf16>
    %18 = vector.shape_cast %17 : vector<1x128x128xbf16> to vector<128x128xbf16>
    %cst_16 = arith.constant dense<0.000000e+00> : vector<8x128xf32>
    %19 = tpu.matmul %16, %18, %cst_16 {dimension_numbers = #tpu.dot_dimension_numbers<[1], [0], [0], [1], [0, 0, 1, 1], [], []>} : vector<8x128xbf16>, vector<128x128xbf16>, vector<8x128xf32> -> vector<8x128xf32>
    %c0_17 = arith.constant 0 : index
    %c0_18 = arith.constant 0 : index
    %c0_19 = arith.constant 0 : index
    %20 = vector.load %arg7[%c0_17, %c0_18, %c0_19] : memref<2x1x128xf32, #tpu.memory_space<vmem>>, vector<1x1x128xf32>
    %21 = vector.shape_cast %20 : vector<1x1x128xf32> to vector<1x128xf32>
    %22 = vector.broadcast %21 : vector<1x128xf32> to vector<8x128xf32>
    %23 = arith.addf %19, %22 : vector<8x128xf32>
    %24 = arith.addf %5, %23 : vector<8x128xf32>
    %25 = arith.truncf %24 : vector<8x128xf32> to vector<8x128xbf16>
    %c1 = arith.constant 1 : index
    %c0_20 = arith.constant 0 : index
    %c0_21 = arith.constant 0 : index
    %26 = vector.load %arg4[%c1, %c0_20, %c0_21] : memref<2x128x128xbf16, #tpu.memory_space<vmem>>, vector<1x128x128xbf16>
    %27 = vector.shape_cast %26 : vector<1x128x128xbf16> to vector<128x128xbf16>
    %cst_22 = arith.constant dense<0.000000e+00> : vector<8x128xf32>
    %28 = tpu.matmul %25, %27, %cst_22 {dimension_numbers = #tpu.dot_dimension_numbers<[1], [0], [0], [1], [0, 0, 1, 1], [], []>} : vector<8x128xbf16>, vector<128x128xbf16>, vector<8x128xf32> -> vector<8x128xf32>
    %c1_23 = arith.constant 1 : index
    %c0_24 = arith.constant 0 : index
    %c0_25 = arith.constant 0 : index
    %29 = vector.load %arg5[%c1_23, %c0_24, %c0_25] : memref<2x1x128xf32, #tpu.memory_space<vmem>>, vector<1x1x128xf32>
    %30 = vector.shape_cast %29 : vector<1x1x128xf32> to vector<1x128xf32>
    %31 = vector.broadcast %30 : vector<1x128xf32> to vector<8x128xf32>
    %32 = arith.addf %28, %31 : vector<8x128xf32>
    %cst_26 = arith.constant 0.000000e+00 : f32
    %33 = vector.broadcast %cst_26 : f32 to vector<8x128xf32>
    %34 = arith.maximumf %32, %33 : vector<8x128xf32>
    %35 = arith.truncf %34 : vector<8x128xf32> to vector<8x128xbf16>
    %c1_27 = arith.constant 1 : index
    %c0_28 = arith.constant 0 : index
    %c0_29 = arith.constant 0 : index
    %36 = vector.load %arg6[%c1_27, %c0_28, %c0_29] : memref<2x128x128xbf16, #tpu.memory_space<vmem>>, vector<1x128x128xbf16>
    %37 = vector.shape_cast %36 : vector<1x128x128xbf16> to vector<128x128xbf16>
    %cst_30 = arith.constant dense<0.000000e+00> : vector<8x128xf32>
    %38 = tpu.matmul %35, %37, %cst_30 {dimension_numbers = #tpu.dot_dimension_numbers<[1], [0], [0], [1], [0, 0, 1, 1], [], []>} : vector<8x128xbf16>, vector<128x128xbf16>, vector<8x128xf32> -> vector<8x128xf32>
    %c1_31 = arith.constant 1 : index
    %c0_32 = arith.constant 0 : index
    %c0_33 = arith.constant 0 : index
    %39 = vector.load %arg7[%c1_31, %c0_32, %c0_33] : memref<2x1x128xf32, #tpu.memory_space<vmem>>, vector<1x1x128xf32>
    %40 = vector.shape_cast %39 : vector<1x1x128xf32> to vector<1x128xf32>
    %41 = vector.broadcast %40 : vector<1x128xf32> to vector<8x128xf32>
    %42 = arith.addf %38, %41 : vector<8x128xf32>
    %43 = arith.addf %24, %42 : vector<8x128xf32>
    %c0_34 = arith.constant 0 : index
    %c0_35 = arith.constant 0 : index
    %44 = vector.load %arg8[%c0_34, %c0_35] : memref<1x128xf32, #tpu.memory_space<vmem>>, vector<1x128xf32>
    %45 = vector.broadcast %44 : vector<1x128xf32> to vector<8x128xf32>
    %46 = arith.mulf %43, %45 : vector<8x128xf32>
    %c0_36 = arith.constant 0 : index
    %c0_37 = arith.constant 0 : index
    %47 = vector.load %arg9[%c0_36, %c0_37] : memref<1x128xf32, #tpu.memory_space<vmem>>, vector<1x128xf32>
    %48 = vector.broadcast %47 : vector<1x128xf32> to vector<8x128xf32>
    %49 = arith.addf %46, %48 : vector<8x128xf32>
    %cst_38 = arith.constant 0.000000e+00 : f32
    %50 = vector.broadcast %cst_38 : f32 to vector<8x128xf32>
    %51 = arith.maximumf %49, %50 : vector<8x128xf32>
    %52 = arith.truncf %51 : vector<8x128xf32> to vector<8x128xbf16>
    %c0_39 = arith.constant 0 : index
    %c0_40 = arith.constant 0 : index
    %53 = vector.load %arg10[%c0_39, %c0_40] : memref<128x128xbf16, #tpu.memory_space<vmem>>, vector<128x128xbf16>
    %cst_41 = arith.constant dense<0.000000e+00> : vector<8x128xf32>
    %54 = tpu.matmul %52, %53, %cst_41 {dimension_numbers = #tpu.dot_dimension_numbers<[1], [0], [0], [1], [0, 0, 1, 1], [], []>} : vector<8x128xbf16>, vector<128x128xbf16>, vector<8x128xf32> -> vector<8x128xf32>
    %c0_42 = arith.constant 0 : index
    %c0_43 = arith.constant 0 : index
    %55 = vector.load %arg11[%c0_42, %c0_43] : memref<1x128xf32, #tpu.memory_space<vmem>>, vector<1x128xf32>
    %56 = vector.broadcast %55 : vector<1x128xf32> to vector<8x128xf32>
    %57 = arith.addf %54, %56 : vector<8x128xf32>
    %c0_44 = arith.constant 0 : index
    %c0_45 = arith.constant 0 : index
    %58 = vector.load %arg12[%c0_44, %c0_45] : memref<8x128xf32, #tpu.memory_space<vmem>>, vector<8x128xf32>
    tpu.vector_store %arg12[%c0_44, %c0_45], %57 {strides = array<i32>} : memref<8x128xf32, #tpu.memory_space<vmem>>, vector<8x128xf32>,
    return
  }
  func.func @transform_0(%arg0: i32) -> (i32, i32) {
    %c0_i32 = arith.constant 0 : i32
    %c0_i32_0 = arith.constant 0 : i32
    return %arg0, %c0_i32 : i32, i32
  }
  func.func @transform_1(%arg0: i32) -> (i32, i32) {
    %c0_i32 = arith.constant 0 : i32
    %c0_i32_0 = arith.constant 0 : i32
    %c0_i32_1 = arith.constant 0 : i32
    return %c0_i32, %c0_i32_0 : i32, i32
  }
  func.func @transform_2(%arg0: i32) -> (i32, i32) {
    %c0_i32 = arith.constant 0 : i32
    %c0_i32_0 = arith.constant 0 : i32
    %c0_i32_1 = arith.constant 0 : i32
    return %c0_i32, %c0_i32_0 : i32, i32
  }
  func.func @transform_3(%arg0: i32) -> (i32, i32, i32) {
    %c0_i32 = arith.constant 0 : i32
    %c0_i32_0 = arith.constant 0 : i32
    %c0_i32_1 = arith.constant 0 : i32
    %c0_i32_2 = arith.constant 0 : i32
    return %c0_i32, %c0_i32_0, %c0_i32_1 : i32, i32, i32
  }
  func.func @transform_4(%arg0: i32) -> (i32, i32, i32) {
    %c0_i32 = arith.constant 0 : i32
    %c0_i32_0 = arith.constant 0 : i32
    %c0_i32_1 = arith.constant 0 : i32
    %c0_i32_2 = arith.constant 0 : i32
    return %c0_i32, %c0_i32_0, %c0_i32_1 : i32, i32, i32
  }
  func.func @transform_5(%arg0: i32) -> (i32, i32, i32) {
    %c0_i32 = arith.constant 0 : i32
    %c0_i32_0 = arith.constant 0 : i32
    %c0_i32_1 = arith.constant 0 : i32
    %c0_i32_2 = arith.constant 0 : i32
    return %c0_i32, %c0_i32_0, %c0_i32_1 : i32, i32, i32
  }
  func.func @transform_6(%arg0: i32) -> (i32, i32, i32) {
    %c0_i32 = arith.constant 0 : i32
    %c0_i32_0 = arith.constant 0 : i32
    %c0_i32_1 = arith.constant 0 : i32
    %c0_i32_2 = arith.constant 0 : i32
    return %c0_i32, %c0_i32_0, %c0_i32_1 : i32, i32, i32
  }
  func.func @transform_7(%arg0: i32) -> (i32, i32) {
    %c0_i32 = arith.constant 0 : i32
    %c0_i32_0 = arith.constant 0 : i32
    %c0_i32_1 = arith.constant 0 : i32
    return %c0_i32, %c0_i32_0 : i32, i32
  }
  func.func @transform_8(%arg0: i32) -> (i32, i32) {
    %c0_i32 = arith.constant 0 : i32
    %c0_i32_0 = arith.constant 0 : i32
    %c0_i32_1 = arith.constant 0 : i32
    return %c0_i32, %c0_i32_0 : i32, i32
  }
  func.func @transform_9(%arg0: i32) -> (i32, i32) {
    %c0_i32 = arith.constant 0 : i32
    %c0_i32_0 = arith.constant 0 : i32
    %c0_i32_1 = arith.constant 0 : i32
    return %c0_i32, %c0_i32_0 : i32, i32
  }
  func.func @transform_10(%arg0: i32) -> (i32, i32) {
    %c0_i32 = arith.constant 0 : i32
    %c0_i32_0 = arith.constant 0 : i32
    %c0_i32_1 = arith.constant 0 : i32
    return %c0_i32, %c0_i32_0 : i32, i32
  }
  func.func @transform_11(%arg0: i32) -> (i32, i32) {
    %c0_i32 = arith.constant 0 : i32
    %c0_i32_0 = arith.constant 0 : i32
    return %arg0, %c0_i32 : i32, i32
  }
}

module attributes {stable_mosaic.version = 11 : i64} {
  func.func @_fused_resnet_kernel(%arg0: i32, %arg1: memref<8x128xbf16, #tpu.memory_space<vmem>>, %arg2: memref<128x128xbf16, #tpu.memory_space<vmem>>, %arg3: memref<1x128xf32, #tpu.memory_space<vmem>>, %arg4: memref<2x128x128xbf16, #tpu.memory_space<vmem>>, %arg5: memref<2x1x128xf32, #tpu.memory_space<vmem>>, %arg6: memref<2x128x128xbf16, #tpu.memory_space<vmem>>, %arg7: memref<2x1x128xf32, #tpu.memory_space<vmem>>, %arg8: memref<1x128xf32, #tpu.memory_space<vmem>>, %arg9: memref<1x128xf32, #tpu.memory_space<vmem>>, %arg10: memref<128x128xbf16, #tpu.memory_space<vmem>>, %arg11: memref<1x128xf32, #tpu.memory_space<vmem>>, %arg12: memref<8x128xf32, #tpu.memory_space<vmem>>) attributes {dimension_semantics = [#tpu.dimension_semantics<parallel>], iteration_bounds = array<i64: 1>, scalar_prefetch = 0 : i64, scratch_operands = 0 : i64, tpu.core_type = #tpu.core_type<tc>, window_params = [{transform_indices = @transform_0, window_bounds = array<i64: 8, 128>}, {pipeline_mode = #tpu.pipeline_mode<synchronous>, transform_indices = @transform_1, window_bounds = array<i64: 128, 128>}, {pipeline_mode = #tpu.pipeline_mode<synchronous>, transform_indices = @transform_2, window_bounds = array<i64: 1, 128>}, {pipeline_mode = #tpu.pipeline_mode<synchronous>, transform_indices = @transform_3, window_bounds = array<i64: 2, 128, 128>}, {pipeline_mode = #tpu.pipeline_mode<synchronous>, transform_indices = @transform_4, window_bounds = array<i64: 2, 1, 128>}, {pipeline_mode = #tpu.pipeline_mode<synchronous>, transform_indices = @transform_5, window_bounds = array<i64: 2, 128, 128>}, {pipeline_mode = #tpu.pipeline_mode<synchronous>, transform_indices = @transform_6, window_bounds = array<i64: 2, 1, 128>}, {pipeline_mode = #tpu.pipeline_mode<synchronous>, transform_indices = @transform_7, window_bounds = array<i64: 1, 128>}, {pipeline_mode = #tpu.pipeline_mode<synchronous>, transform_indices = @transform_8, window_bounds = array<i64: 1, 128>}, {pipeline_mode = #tpu.pipeline_mode<synchronous>, transform_indices = @transform_9, window_bounds = array<i64: 128, 128>}, {pipeline_mode = #tpu.pipeline_mode<synchronous>, transform_indices = @transform_10, window_bounds = array<i64: 1, 128>}, {transform_indices = @transform_11, window_bounds = array<i64: 8, 128>}]} {
    %c0 = arith.constant 0 : index
    %c0_0 = arith.constant 0 : index
    %0 = vector.load %arg1[%c0, %c0_0] : memref<8x128xbf16, #tpu.memory_space<vmem>>, vector<8x128xbf16>
    %c0_1 = arith.constant 0 : index
    %c0_2 = arith.constant 0 : index
    %1 = vector.load %arg2[%c0_1, %c0_2] : memref<128x128xbf16, #tpu.memory_space<vmem>>, vector<128x128xbf16>
    %cst = arith.constant dense<0.000000e+00> : vector<8x128xf32>
    %2 = tpu.matmul %0, %1, %cst {dimension_numbers = #tpu.dot_dimension_numbers<[1], [0], [0], [1], [0, 0, 1, 1], [], []>} : vector<8x128xbf16>, vector<128x128xbf16>, vector<8x128xf32> -> vector<8x128xf32>
    %c0_3 = arith.constant 0 : index
    %c0_4 = arith.constant 0 : index
    %3 = vector.load %arg3[%c0_3, %c0_4] : memref<1x128xf32, #tpu.memory_space<vmem>>, vector<1x128xf32>
    %4 = vector.broadcast %3 : vector<1x128xf32> to vector<8x128xf32>
    %5 = arith.addf %2, %4 : vector<8x128xf32>
    %6 = arith.truncf %5 : vector<8x128xf32> to vector<8x128xbf16>
    %c0_5 = arith.constant 0 : index
    %c0_6 = arith.constant 0 : index
    %c0_7 = arith.constant 0 : index
    %7 = vector.load %arg4[%c0_5, %c0_6, %c0_7] : memref<2x128x128xbf16, #tpu.memory_space<vmem>>, vector<1x128x128xbf16>
    %8 = vector.shape_cast %7 : vector<1x128x128xbf16> to vector<128x128xbf16>
    %cst_8 = arith.constant dense<0.000000e+00> : vector<8x128xf32>
    %9 = tpu.matmul %6, %8, %cst_8 {dimension_numbers = #tpu.dot_dimension_numbers<[1], [0], [0], [1], [0, 0, 1, 1], [], []>} : vector<8x128xbf16>, vector<128x128xbf16>, vector<8x128xf32> -> vector<8x128xf32>
    %c0_9 = arith.constant 0 : index
    %c0_10 = arith.constant 0 : index
    %c0_11 = arith.constant 0 : index
    %10 = vector.load %arg5[%c0_9, %c0_10, %c0_11] : memref<2x1x128xf32, #tpu.memory_space<vmem>>, vector<1x1x128xf32>
    %11 = vector.shape_cast %10 : vector<1x1x128xf32> to vector<1x128xf32>
    %12 = vector.broadcast %11 : vector<1x128xf32> to vector<8x128xf32>
    %13 = arith.addf %9, %12 : vector<8x128xf32>
    %cst_12 = arith.constant 0.000000e+00 : f32
    %14 = vector.broadcast %cst_12 : f32 to vector<8x128xf32>
    %15 = arith.maximumf %13, %14 : vector<8x128xf32>
    %16 = arith.truncf %15 : vector<8x128xf32> to vector<8x128xbf16>
    %c0_13 = arith.constant 0 : index
    %c0_14 = arith.constant 0 : index
    %c0_15 = arith.constant 0 : index
    %17 = vector.load %arg6[%c0_13, %c0_14, %c0_15] : memref<2x128x128xbf16, #tpu.memory_space<vmem>>, vector<1x128x128xbf16>
    %18 = vector.shape_cast %17 : vector<1x128x128xbf16> to vector<128x128xbf16>
    %cst_16 = arith.constant dense<0.000000e+00> : vector<8x128xf32>
    %19 = tpu.matmul %16, %18, %cst_16 {dimension_numbers = #tpu.dot_dimension_numbers<[1], [0], [0], [1], [0, 0, 1, 1], [], []>} : vector<8x128xbf16>, vector<128x128xbf16>, vector<8x128xf32> -> vector<8x128xf32>
    %c0_17 = arith.constant 0 : index
    %c0_18 = arith.constant 0 : index
    %c0_19 = arith.constant 0 : index
    %20 = vector.load %arg7[%c0_17, %c0_18, %c0_19] : memref<2x1x128xf32, #tpu.memory_space<vmem>>, vector<1x1x128xf32>
    %21 = vector.shape_cast %20 : vector<1x1x128xf32> to vector<1x128xf32>
    %22 = vector.broadcast %21 : vector<1x128xf32> to vector<8x128xf32>
    %23 = arith.addf %19, %22 : vector<8x128xf32>
    %24 = arith.addf %5, %23 : vector<8x128xf32>
    %25 = arith.truncf %24 : vector<8x128xf32> to vector<8x128xbf16>
    %c1 = arith.constant 1 : index
    %c0_20 = arith.constant 0 : index
    %c0_21 = arith.constant 0 : index
    %26 = vector.load %arg4[%c1, %c0_20, %c0_21] : memref<2x128x128xbf16, #tpu.memory_space<vmem>>, vector<1x128x128xbf16>
    %27 = vector.shape_cast %26 : vector<1x128x128xbf16> to vector<128x128xbf16>
    %cst_22 = arith.constant dense<0.000000e+00> : vector<8x128xf32>
    %28 = tpu.matmul %25, %27, %cst_22 {dimension_numbers = #tpu.dot_dimension_numbers<[1], [0], [0], [1], [0, 0, 1, 1], [], []>} : vector<8x128xbf16>, vector<128x128xbf16>, vector<8x128xf32> -> vector<8x128xf32>
    %c1_23 = arith.constant 1 : index
    %c0_24 = arith.constant 0 : index
    %c0_25 = arith.constant 0 : index
    %29 = vector.load %arg5[%c1_23, %c0_24, %c0_25] : memref<2x1x128xf32, #tpu.memory_space<vmem>>, vector<1x1x128xf32>
    %30 = vector.shape_cast %29 : vector<1x1x128xf32> to vector<1x128xf32>
    %31 = vector.broadcast %30 : vector<1x128xf32> to vector<8x128xf32>
    %32 = arith.addf %28, %31 : vector<8x128xf32>
    %cst_26 = arith.constant 0.000000e+00 : f32
    %33 = vector.broadcast %cst_26 : f32 to vector<8x128xf32>
    %34 = arith.maximumf %32, %33 : vector<8x128xf32>
    %35 = arith.truncf %34 : vector<8x128xf32> to vector<8x128xbf16>
    %c1_27 = arith.constant 1 : index
    %c0_28 = arith.constant 0 : index
    %c0_29 = arith.constant 0 : index
    %36 = vector.load %arg6[%c1_27, %c0_28, %c0_29] : memref<2x128x128xbf16, #tpu.memory_space<vmem>>, vector<1x128x128xbf16>
    %37 = vector.shape_cast %36 : vector<1x128x128xbf16> to vector<128x128xbf16>
    %cst_30 = arith.constant dense<0.000000e+00> : vector<8x128xf32>
    %38 = tpu.matmul %35, %37, %cst_30 {dimension_numbers = #tpu.dot_dimension_numbers<[1], [0], [0], [1], [0, 0, 1, 1], [], []>} : vector<8x128xbf16>, vector<128x128xbf16>, vector<8x128xf32> -> vector<8x128xf32>
    %c1_31 = arith.constant 1 : index
    %c0_32 = arith.constant 0 : index
    %c0_33 = arith.constant 0 : index
    %39 = vector.load %arg7[%c1_31, %c0_32, %c0_33] : memref<2x1x128xf32, #tpu.memory_space<vmem>>, vector<1x1x128xf32>
    %40 = vector.shape_cast %39 : vector<1x1x128xf32> to vector<1x128xf32>
    %41 = vector.broadcast %40 : vector<1x128xf32> to vector<8x128xf32>
    %42 = arith.addf %38, %41 : vector<8x128xf32>
    %43 = arith.addf %24, %42 : vector<8x128xf32>
    %c0_34 = arith.constant 0 : index
    %c0_35 = arith.constant 0 : index
    %44 = vector.load %arg8[%c0_34, %c0_35] : memref<1x128xf32, #tpu.memory_space<vmem>>, vector<1x128xf32>
    %45 = vector.broadcast %44 : vector<1x128xf32> to vector<8x128xf32>
    %46 = arith.mulf %43, %45 : vector<8x128xf32>
    %c0_36 = arith.constant 0 : index
    %c0_37 = arith.constant 0 : index
    %47 = vector.load %arg9[%c0_36, %c0_37] : memref<1x128xf32, #tpu.memory_space<vmem>>, vector<1x128xf32>
    %48 = vector.broadcast %47 : vector<1x128xf32> to vector<8x128xf32>
    %49 = arith.addf %46, %48 : vector<8x128xf32>
    %cst_38 = arith.constant 0.000000e+00 : f32
    %50 = vector.broadcast %cst_38 : f32 to vector<8x128xf32>
    %51 = arith.maximumf %49, %50 : vector<8x128xf32>
    %52 = arith.truncf %51 : vector<8x128xf32> to vector<8x128xbf16>
    %c0_39 = arith.constant 0 : index
    %c0_40 = arith.constant 0 : index
    %53 = vector.load %arg10[%c0_39, %c0_40] : memref<128x128xbf16, #tpu.memory_space<vmem>>, vector<128x128xbf16>
    %cst_41 = arith.constant dense<0.000000e+00> : vector<8x128xf32>
    %54 = tpu.matmul %52, %53, %cst_41 {dimension_numbers = #tpu.dot_dimension_numbers<[1], [0], [0], [1], [0, 0, 1, 1], [], []>} : vector<8x128xbf16>, vector<128x128xbf16>, vector<8x128xf32> -> vector<8x128xf32>
    %c0_42 = arith.constant 0 : index
    %c0_43 = arith.constant 0 : index
    %55 = vector.load %arg11[%c0_42, %c0_43] : memref<1x128xf32, #tpu.memory_space<vmem>>, vector<1x128xf32>
    %56 = vector.broadcast %55 : vector<1x128xf32> to vector<8x128xf32>
    %57 = arith.addf %54, %56 : vector<8x128xf32>
    %c0_44 = arith.constant 0 : index
    %c0_45 = arith.constant 0 : index
    %58 = vector.load %arg12[%c0_44, %c0_45] : memref<8x128xf32, #tpu.memory_space<vmem>>, vector<8x128xf32>
    tpu.vector_store %arg12[%c0_44, %c0_45], %57 {strides = array<i32>} : memref<8x128xf32, #tpu.memory_space<vmem>>, vector<8x128xf32>,
    return
  }
  func.func @transform_0(%arg0: i32) -> (i32, i32) {
    %c0_i32 = arith.constant 0 : i32
    %c0_i32_0 = arith.constant 0 : i32
    return %arg0, %c0_i32 : i32, i32
  }
  func.func @transform_1(%arg0: i32) -> (i32, i32) {
    %c0_i32 = arith.constant 0 : i32
    %c0_i32_0 = arith.constant 0 : i32
    %c0_i32_1 = arith.constant 0 : i32
    return %c0_i32, %c0_i32_0 : i32, i32
  }
  func.func @transform_2(%arg0: i32) -> (i32, i32) {
    %c0_i32 = arith.constant 0 : i32
    %c0_i32_0 = arith.constant 0 : i32
    %c0_i32_1 = arith.constant 0 : i32
    return %c0_i32, %c0_i32_0 : i32, i32
  }
  func.func @transform_3(%arg0: i32) -> (i32, i32, i32) {
    %c0_i32 = arith.constant 0 : i32
    %c0_i32_0 = arith.constant 0 : i32
    %c0_i32_1 = arith.constant 0 : i32
    %c0_i32_2 = arith.constant 0 : i32
    return %c0_i32, %c0_i32_0, %c0_i32_1 : i32, i32, i32
  }
  func.func @transform_4(%arg0: i32) -> (i32, i32, i32) {
    %c0_i32 = arith.constant 0 : i32
    %c0_i32_0 = arith.constant 0 : i32
    %c0_i32_1 = arith.constant 0 : i32
    %c0_i32_2 = arith.constant 0 : i32
    return %c0_i32, %c0_i32_0, %c0_i32_1 : i32, i32, i32
  }
  func.func @transform_5(%arg0: i32) -> (i32, i32, i32) {
    %c0_i32 = arith.constant 0 : i32
    %c0_i32_0 = arith.constant 0 : i32
    %c0_i32_1 = arith.constant 0 : i32
    %c0_i32_2 = arith.constant 0 : i32
    return %c0_i32, %c0_i32_0, %c0_i32_1 : i32, i32, i32
  }
  func.func @transform_6(%arg0: i32) -> (i32, i32, i32) {
    %c0_i32 = arith.constant 0 : i32
    %c0_i32_0 = arith.constant 0 : i32
    %c0_i32_1 = arith.constant 0 : i32
    %c0_i32_2 = arith.constant 0 : i32
    return %c0_i32, %c0_i32_0, %c0_i32_1 : i32, i32, i32
  }
  func.func @transform_7(%arg0: i32) -> (i32, i32) {
    %c0_i32 = arith.constant 0 : i32
    %c0_i32_0 = arith.constant 0 : i32
    %c0_i32_1 = arith.constant 0 : i32
    return %c0_i32, %c0_i32_0 : i32, i32
  }
  func.func @transform_8(%arg0: i32) -> (i32, i32) {
    %c0_i32 = arith.constant 0 : i32
    %c0_i32_0 = arith.constant 0 : i32
    %c0_i32_1 = arith.constant 0 : i32
    return %c0_i32, %c0_i32_0 : i32, i32
  }
  func.func @transform_9(%arg0: i32) -> (i32, i32) {
    %c0_i32 = arith.constant 0 : i32
    %c0_i32_0 = arith.constant 0 : i32
    %c0_i32_1 = arith.constant 0 : i32
    return %c0_i32, %c0_i32_0 : i32, i32
  }
  func.func @transform_10(%arg0: i32) -> (i32, i32) {
    %c0_i32 = arith.constant 0 : i32
    %c0_i32_0 = arith.constant 0 : i32
    %c0_i32_1 = arith.constant 0 : i32
    return %c0_i32, %c0_i32_0 : i32, i32
  }
  func.func @transform_11(%arg0: i32) -> (i32, i32) {
    %c0_i32 = arith.constant 0 : i32
    %c0_i32_0 = arith.constant 0 : i32
    return %arg0, %c0_i32 : i32, i32
  }
}

</mosaic_0001>

<llo_original>
// kernel: tpu_custom_call.1
$region0: #{tpu_custom_call.1}
  #allocation0 [shape = 'u32[]', space=smem, size = 0x4, offset = 0x4, fixed_abs, tag = 'smem constant byte address 0x4 - core index']
  #allocation1 [shape = 'u32[144,128]{1,0:T(1,128)}', space=vmem, size = 0x12000, scoped, tag = 'internal scratch']
  %s0 = inlined_call_operand.hbm [shape: bf16[8,128], index: 0, kind: input, shape index: {}]
  %s1 = inlined_call_operand.hbm [shape: bf16[128,128], index: 1, kind: input, shape index: {}]
  %s2 = inlined_call_operand.vmem [shape: f32[1,128], index: 2, kind: input, shape index: {}]
  %s3 = inlined_call_operand.hbm [shape: bf16[2,128,128], index: 3, kind: input, shape index: {}]
  %s4 = inlined_call_operand.vmem [shape: f32[2,1,128], index: 4, kind: input, shape index: {}]
  %s5 = inlined_call_operand.hbm [shape: bf16[2,128,128], index: 5, kind: input, shape index: {}]
  %s6 = inlined_call_operand.vmem [shape: f32[2,1,128], index: 6, kind: input, shape index: {}]
  %s7 = inlined_call_operand.vmem [shape: f32[1,128], index: 7, kind: input, shape index: {}]
  %s8 = inlined_call_operand.vmem [shape: f32[1,128], index: 8, kind: input, shape index: {}]
  %s9 = inlined_call_operand.hbm [shape: bf16[128,128], index: 9, kind: input, shape index: {}]
  %s10 = inlined_call_operand.vmem [shape: f32[1,128], index: 10, kind: input, shape index: {}]
  %s11 = inlined_call_operand.hbm [shape: f32[8,128], index: 11, kind: output, shape index: {}]
  %s12 = sld [smem:[#allocation0]]
  $region74: #{tpu_custom_call.1} parent=0
    _
  %s14 = ssub.s32 1, %s12
  %s15 = scalar_select 0, %s14, %s12
  $region1: #{tpu_custom_call.1} parent=0
    #allocation2 [shape = 'u8[2048]{0}', space=vmem, size = 0x800, scoped, tag = 'input window, operand 0, single buffered']
    #allocation3 [shape = 's32[1]{0}', space=sflag, size = 0x4, scoped, tag = 'scoped memory for tpu_custom_call.1']
    #allocation4 [shape = 's32[1]{0}', space=sflag, size = 0x4, scoped, tag = 'scoped memory for tpu_custom_call.1']
    #allocation5 [shape = 'u8[32768]{0}', space=vmem, size = 0x8000, scoped, tag = 'input window, operand 1, single buffered']
    #allocation6 [shape = 's32[1]{0}', space=sflag, size = 0x4, scoped, tag = 'scoped memory for tpu_custom_call.1']
    #allocation7 [shape = 'u8[65536]{0}', space=vmem, size = 0x10000, scoped, tag = 'input window, operand 3, single buffered']
    #allocation8 [shape = 'u8[65536]{0}', space=vmem, size = 0x10000, scoped, tag = 'input window, operand 5, single buffered']
    #allocation9 [shape = 's32[1]{0}', space=sflag, size = 0x4, scoped, tag = 'scoped memory for tpu_custom_call.1']
    #allocation10 [shape = 'u8[32768]{0}', space=vmem, size = 0x8000, scoped, tag = 'input window, operand 9, single buffered']
    #allocation11 [shape = 'u8[4096]{0}', space=vmem, size = 0x1000, scoped, tag = 'output window, operand 0, single buffered']
    %16 = vsyncpa [#allocation3], 0
    %17 = vsyncpa [#allocation6], 0
    %18 = vsyncpa [#allocation9], 0
    %19 = vsyncpa [#allocation4], 0
    // Predicated region
    $region2: #{tpu_custom_call.1} parent=1 // pred_check
      _
    $region3: #{tpu_custom_call.1} parent=1 // pred_check_branch
      %21 = sbr.rel (0) target = $region5
    $region4: #{tpu_custom_call.1} parent=1 // pred_region
      %s23 = ssub.s32 64, 64
      %24 = vsyncadd [#allocation3], %s23
      %s26 = sshll.u32 [#allocation2], 4
      %s27 = int_to_ptr.vmem [resolvable:$true] %s26
      %29 = dma.hbm_to_vmem [thread:$0]  %s0, 64, %s27, [#allocation3]
    $region5: #{tpu_custom_call.1} parent=1 // pred_fallthru
      _
    // Predicated region
    $region6: #{tpu_custom_call.1} parent=1 // pred_check
      _
    $region7: #{tpu_custom_call.1} parent=1 // pred_check_branch
      %31 = sbr.rel (0) target = $region9
    $region8: #{tpu_custom_call.1} parent=1 // pred_region
      %s33 = ssub.s32 1024, 1024
      %34 = vsyncadd [#allocation6], %s33
      %s35 = sshll.u32 [#allocation5], 4
      %s36 = int_to_ptr.vmem [resolvable:$true] %s35
      %41 = dma.hbm_to_vmem [thread:$0]  %s1, 1024, %s36, [#allocation6], 64, 64, 4
    $region9: #{tpu_custom_call.1} parent=1 // pred_fallthru
      _
    // Predicated region
    $region10: #{tpu_custom_call.1} parent=1 // pred_check
      _
    $region11: #{tpu_custom_call.1} parent=1 // pred_check_branch
      %43 = sbr.rel (0) target = $region13
    $region12: #{tpu_custom_call.1} parent=1 // pred_region
      _
    $region13: #{tpu_custom_call.1} parent=1 // pred_fallthru
      _
    // Predicated region
    $region14: #{tpu_custom_call.1} parent=1 // pred_check
      _
    $region15: #{tpu_custom_call.1} parent=1 // pred_check_branch
      %45 = sbr.rel (0) target = $region17
    $region16: #{tpu_custom_call.1} parent=1 // pred_region
      %s47 = ssub.s32 2048, 2048
      %48 = vsyncadd [#allocation6], %s47
      %s49 = sshll.u32 [#allocation7], 4
      %s50 = int_to_ptr.vmem [resolvable:$true] %s49
      %55 = dma.hbm_to_vmem [thread:$0]  %s3, 2048, %s50, [#allocation6], 64, 64, 4
    $region17: #{tpu_custom_call.1} parent=1 // pred_fallthru
      _
    // Predicated region
    $region18: #{tpu_custom_call.1} parent=1 // pred_check
      _
    $region19: #{tpu_custom_call.1} parent=1 // pred_check_branch
      %57 = sbr.rel (0) target = $region21
    $region20: #{tpu_custom_call.1} parent=1 // pred_region
      _
    $region21: #{tpu_custom_call.1} parent=1 // pred_fallthru
      _
    // Predicated region
    $region22: #{tpu_custom_call.1} parent=1 // pred_check
      _
    $region23: #{tpu_custom_call.1} parent=1 // pred_check_branch
      %59 = sbr.rel (0) target = $region25
    $region24: #{tpu_custom_call.1} parent=1 // pred_region
      %s61 = ssub.s32 2048, 2048
      %62 = vsyncadd [#allocation9], %s61
      %s63 = sshll.u32 [#allocation8], 4
      %s64 = int_to_ptr.vmem [resolvable:$true] %s63
      %69 = dma.hbm_to_vmem [thread:$0]  %s5, 2048, %s64, [#allocation9], 64, 64, 4
    $region25: #{tpu_custom_call.1} parent=1 // pred_fallthru
      _
    // Predicated region
    $region26: #{tpu_custom_call.1} parent=1 // pred_check
      _
    $region27: #{tpu_custom_call.1} parent=1 // pred_check_branch
      %71 = sbr.rel (0) target = $region29
    $region28: #{tpu_custom_call.1} parent=1 // pred_region
      _
    $region29: #{tpu_custom_call.1} parent=1 // pred_fallthru
      _
    // Predicated region
    $region30: #{tpu_custom_call.1} parent=1 // pred_check
      _
    $region31: #{tpu_custom_call.1} parent=1 // pred_check_branch
      %73 = sbr.rel (0) target = $region33
    $region32: #{tpu_custom_call.1} parent=1 // pred_region
      _
    $region33: #{tpu_custom_call.1} parent=1 // pred_fallthru
      _
    // Predicated region
    $region34: #{tpu_custom_call.1} parent=1 // pred_check
      _
    $region35: #{tpu_custom_call.1} parent=1 // pred_check_branch
      %75 = sbr.rel (0) target = $region37
    $region36: #{tpu_custom_call.1} parent=1 // pred_region
      _
    $region37: #{tpu_custom_call.1} parent=1 // pred_fallthru
      _
    // Predicated region
    $region38: #{tpu_custom_call.1} parent=1 // pred_check
      _
    $region39: #{tpu_custom_call.1} parent=1 // pred_check_branch
      %77 = sbr.rel (0) target = $region41
    $region40: #{tpu_custom_call.1} parent=1 // pred_region
      %s79 = ssub.s32 1024, 1024
      %80 = vsyncadd [#allocation9], %s79
      %s81 = sshll.u32 [#allocation10], 4
      %s82 = int_to_ptr.vmem [resolvable:$true] %s81
      %87 = dma.hbm_to_vmem [thread:$0]  %s9, 1024, %s82, [#allocation9], 64, 64, 4
    $region41: #{tpu_custom_call.1} parent=1 // pred_fallthru
      _
    // Predicated region
    $region42: #{tpu_custom_call.1} parent=1 // pred_check
      _
    $region43: #{tpu_custom_call.1} parent=1 // pred_check_branch
      %89 = sbr.rel (0) target = $region45
    $region44: #{tpu_custom_call.1} parent=1 // pred_region
      _
    $region45: #{tpu_custom_call.1} parent=1 // pred_fallthru
      _
    // Predicated region
    $region46: #{tpu_custom_call.1} parent=1 // pred_check
      _
    $region47: #{tpu_custom_call.1} parent=1 // pred_check_branch
      %91 = sbr.rel (0) target = $region49
    $region48: #{tpu_custom_call.1} parent=1 // pred_region
      %92 = dma.done [#allocation3], 64
    $region49: #{tpu_custom_call.1} parent=1 // pred_fallthru
      _
    // Predicated region
    $region50: #{tpu_custom_call.1} parent=1 // pred_check
      _
    $region51: #{tpu_custom_call.1} parent=1 // pred_check_branch
      %94 = sbr.rel (0) target = $region53
    $region52: #{tpu_custom_call.1} parent=1 // pred_region
      %95 = dma.done [#allocation6], 1024
    $region53: #{tpu_custom_call.1} parent=1 // pred_fallthru
      _
    // Predicated region
    $region54: #{tpu_custom_call.1} parent=1 // pred_check
      _
    $region55: #{tpu_custom_call.1} parent=1 // pred_check_branch
      %97 = sbr.rel (0) target = $region57
    $region56: #{tpu_custom_call.1} parent=1 // pred_region
      %98 = dma.done [#allocation6], 2048
    $region57: #{tpu_custom_call.1} parent=1 // pred_fallthru
      _
    // Predicated region
    $region58: #{tpu_custom_call.1} parent=1 // pred_check
      _
    $region59: #{tpu_custom_call.1} parent=1 // pred_check_branch
      %100 = sbr.rel (0) target = $region61
    $region60: #{tpu_custom_call.1} parent=1 // pred_region
      %101 = dma.done [#allocation9], 2048
    $region61: #{tpu_custom_call.1} parent=1 // pred_fallthru
      _
    // Predicated region
    $region62: #{tpu_custom_call.1} parent=1 // pred_check
      _
    $region63: #{tpu_custom_call.1} parent=1 // pred_check_branch
      %103 = sbr.rel (0) target = $region65
    $region64: #{tpu_custom_call.1} parent=1 // pred_region
      %104 = dma.done [#allocation9], 1024
    $region65: #{tpu_custom_call.1} parent=1 // pred_fallthru
      _
    %v106 = vld [vmem:[#allocation2] sm:$0xf]
    %v107 = vld [vmem:[#allocation5] sm:$0xf]
    %v108 = vld [vmem:[#allocation5 + $0x4] sm:$0xf]
    %v109 = vld [vmem:[#allocation5 + $0x8] sm:$0xf]
    %v110 = vld [vmem:[#allocation5 + $0xc] sm:$0xf]
    %v111 = vld [vmem:[#allocation5 + $0x10] sm:$0xf]
    %v112 = vld [vmem:[#allocation5 + $0x14] sm:$0xf]
    %v113 = vld [vmem:[#allocation5 + $0x18] sm:$0xf]
    %v114 = vld [vmem:[#allocation5 + $0x1c] sm:$0xf]
    %v115 = vld [vmem:[#allocation5 + $0x20] sm:$0xf]
    %v116 = vld [vmem:[#allocation5 + $0x24] sm:$0xf]
    %v117 = vld [vmem:[#allocation5 + $0x28] sm:$0xf]
    %v118 = vld [vmem:[#allocation5 + $0x2c] sm:$0xf]
    %v119 = vld [vmem:[#allocation5 + $0x30] sm:$0xf]
    %v120 = vld [vmem:[#allocation5 + $0x34] sm:$0xf]
    %v121 = vld [vmem:[#allocation5 + $0x38] sm:$0xf]
    %v122 = vld [vmem:[#allocation5 + $0x3c] sm:$0xf]
    %v123 = vld [vmem:[%s2] sm:$0x1]
    %v125 = vlaneseq
    %v126 = vshrl.u32 %v125, 7
    %v127 = vsub.s32 0, %v126
    %v128 = vrot.slane %v123, %v127
    %v146 = vunpack.c.l.b16 %v107
    %v147 = vunpack.c.l.b16 %v108
    %v148 = vunpack.c.l.b16 %v109
    %v149 = vunpack.c.l.b16 %v110
    %v150 = vunpack.c.l.b16 %v111
    %v151 = vunpack.c.l.b16 %v112
    %v152 = vunpack.c.l.b16 %v113
    %v153 = vunpack.c.l.b16 %v114
    %v154 = vunpack.c.l.b16 %v115
    %v155 = vunpack.c.l.b16 %v116
    %v156 = vunpack.c.l.b16 %v117
    %v157 = vunpack.c.l.b16 %v118
    %v158 = vunpack.c.l.b16 %v119
    %v159 = vunpack.c.l.b16 %v120
    %v160 = vunpack.c.l.b16 %v121
    %v161 = vunpack.c.l.b16 %v122
    %v162 = vpack.c.b16 %v147, %v146
    %v163 = vpack.c.b16 %v149, %v148
    %v164 = vpack.c.b16 %v151, %v150
    %v165 = vpack.c.b16 %v153, %v152
    %v166 = vpack.c.b16 %v155, %v154
    %v167 = vpack.c.b16 %v157, %v156
    %v168 = vpack.c.b16 %v159, %v158
    %v169 = vpack.c.b16 %v161, %v160
    %178 = vmatprep.subr.bf16.mxu0 0
    %179 = vmatpush1.bf16.msra.mxu0 %v169
    %180 = vmatprep.subr.bf16.mxu0 0
    %181 = vmatpush1.bf16.msra.mxu0 %v168
    %182 = vmatprep.subr.bf16.mxu0 0
    %183 = vmatpush1.bf16.msra.mxu0 %v167
    %184 = vmatprep.subr.bf16.mxu0 0
    %185 = vmatpush1.bf16.msra.mxu0 %v166
    %186 = vmatprep.subr.bf16.mxu0 0
    %187 = vmatpush1.bf16.msra.mxu0 %v165
    %188 = vmatprep.subr.bf16.mxu0 0
    %189 = vmatpush1.bf16.msra.mxu0 %v164
    %190 = vmatprep.subr.bf16.mxu0 0
    %191 = vmatpush1.bf16.msra.mxu0 %v163
    %192 = vmatprep.subr.bf16.mxu0 0
    %193 = vmatpush1.bf16.msra.mxu0 %v162
    %194 = vmatprep.subr.bf16.mxu0 0
    %195 = vmatpush2.bf16.msra.mxu0 0
    %196 = vmatprep.subr.bf16.mxu0 0
    %197 = vmatpush2.bf16.msra.mxu0 0
    %198 = vmatprep.subr.bf16.mxu0 0
    %199 = vmatpush2.bf16.msra.mxu0 0
    %200 = vmatprep.subr.bf16.mxu0 0
    %201 = vmatpush2.bf16.msra.mxu0 0
    %202 = vmatprep.subr.bf16.mxu0 0
    %203 = vmatpush2.bf16.msra.mxu0 0
    %204 = vmatprep.subr.bf16.mxu0 0
    %205 = vmatpush2.bf16.msra.mxu0 0
    %206 = vmatprep.subr.bf16.mxu0 0
    %207 = vmatpush2.bf16.msra.mxu0 0
    %208 = vmatprep.subr.bf16.mxu0 0
    %209 = vmatpush2.bf16.msra.mxu0 0
    %210 = vmatprep.mubr.bf16.mxu0 0
    %211 = vmatmul.mubr.bf16.gmra.mxu0 %v106
    %v212 = vpop.f32.mrf.mxu0
    %v213 = vadd.f32 %v128, %v212
    %v214 = vpop.f32.mrf.mxu0
    %v215 = vpop.f32.mrf.mxu0
    %v216 = vpop.f32.mrf.mxu0
    %217 = vdwg.mxu0
    %v218 = vpack.c.bf16 %v213, %v213
    %v219 = vld [vmem:[#allocation7] sm:$0xf]
    %v220 = vld [vmem:[#allocation7 + $0x4] sm:$0xf]
    %v221 = vld [vmem:[#allocation7 + $0x8] sm:$0xf]
    %v222 = vld [vmem:[#allocation7 + $0xc] sm:$0xf]
    %v223 = vld [vmem:[#allocation7 + $0x10] sm:$0xf]
    %v224 = vld [vmem:[#allocation7 + $0x14] sm:$0xf]
    %v225 = vld [vmem:[#allocation7 + $0x18] sm:$0xf]
    %v226 = vld [vmem:[#allocation7 + $0x1c] sm:$0xf]
    %v227 = vld [vmem:[#allocation7 + $0x20] sm:$0xf]
    %v228 = vld [vmem:[#allocation7 + $0x24] sm:$0xf]
    %v229 = vld [vmem:[#allocation7 + $0x28] sm:$0xf]
    %v230 = vld [vmem:[#allocation7 + $0x2c] sm:$0xf]
    %v231 = vld [vmem:[#allocation7 + $0x30] sm:$0xf]
    %v232 = vld [vmem:[#allocation7 + $0x34] sm:$0xf]
    %v233 = vld [vmem:[#allocation7 + $0x38] sm:$0xf]
    %v234 = vld [vmem:[#allocation7 + $0x3c] sm:$0xf]
    %v235 = vld [vmem:[%s4] sm:$0x1]
    %v237 = vlaneseq
    %v238 = vshrl.u32 %v237, 7
    %v239 = vsub.s32 0, %v238
    %v240 = vrot.slane %v235, %v239
    %v258 = vunpack.c.l.b16 %v219
    %v259 = vunpack.c.l.b16 %v220
    %v260 = vunpack.c.l.b16 %v221
    %v261 = vunpack.c.l.b16 %v222
    %v262 = vunpack.c.l.b16 %v223
    %v263 = vunpack.c.l.b16 %v224
    %v264 = vunpack.c.l.b16 %v225
    %v265 = vunpack.c.l.b16 %v226
    %v266 = vunpack.c.l.b16 %v227
    %v267 = vunpack.c.l.b16 %v228
    %v268 = vunpack.c.l.b16 %v229
    %v269 = vunpack.c.l.b16 %v230
    %v270 = vunpack.c.l.b16 %v231
    %v271 = vunpack.c.l.b16 %v232
    %v272 = vunpack.c.l.b16 %v233
    %v273 = vunpack.c.l.b16 %v234
    %v274 = vpack.c.b16 %v259, %v258
    %v275 = vpack.c.b16 %v261, %v260
    %v276 = vpack.c.b16 %v263, %v262
    %v277 = vpack.c.b16 %v265, %v264
    %v278 = vpack.c.b16 %v267, %v266
    %v279 = vpack.c.b16 %v269, %v268
    %v280 = vpack.c.b16 %v271, %v270
    %v281 = vpack.c.b16 %v273, %v272
    %290 = vmatprep.subr.bf16.mxu0 0
    %291 = vmatpush1.bf16.msra.mxu0 %v281
    %292 = vmatprep.subr.bf16.mxu0 0
    %293 = vmatpush1.bf16.msra.mxu0 %v280
    %294 = vmatprep.subr.bf16.mxu0 0
    %295 = vmatpush1.bf16.msra.mxu0 %v279
    %296 = vmatprep.subr.bf16.mxu0 0
    %297 = vmatpush1.bf16.msra.mxu0 %v278
    %298 = vmatprep.subr.bf16.mxu0 0
    %299 = vmatpush1.bf16.msra.mxu0 %v277
    %300 = vmatprep.subr.bf16.mxu0 0
    %301 = vmatpush1.bf16.msra.mxu0 %v276
    %302 = vmatprep.subr.bf16.mxu0 0
    %303 = vmatpush1.bf16.msra.mxu0 %v275
    %304 = vmatprep.subr.bf16.mxu0 0
    %305 = vmatpush1.bf16.msra.mxu0 %v274
    %306 = vmatprep.subr.bf16.mxu0 0
    %307 = vmatpush2.bf16.msra.mxu0 0
    %308 = vmatprep.subr.bf16.mxu0 0
    %309 = vmatpush2.bf16.msra.mxu0 0
    %310 = vmatprep.subr.bf16.mxu0 0
    %311 = vmatpush2.bf16.msra.mxu0 0
    %312 = vmatprep.subr.bf16.mxu0 0
    %313 = vmatpush2.bf16.msra.mxu0 0
    %314 = vmatprep.subr.bf16.mxu0 0
    %315 = vmatpush2.bf16.msra.mxu0 0
    %316 = vmatprep.subr.bf16.mxu0 0
    %317 = vmatpush2.bf16.msra.mxu0 0
    %318 = vmatprep.subr.bf16.mxu0 0
    %319 = vmatpush2.bf16.msra.mxu0 0
    %320 = vmatprep.subr.bf16.mxu0 0
    %321 = vmatpush2.bf16.msra.mxu0 0
    %322 = vmatprep.mubr.bf16.mxu0 0
    %323 = vmatmul.mubr.bf16.gmra.mxu0 %v218
    %v324 = vpop.f32.mrf.mxu0
    %v325 = vadd.f32 %v240, %v324
    %v326 = vpop.f32.mrf.mxu0
    %v327 = vpop.f32.mrf.mxu0
    %v328 = vpop.f32.mrf.mxu0
    %329 = vdwg.mxu0
    %v330 = vmax.f32 %v325, 0.0
    %v331 = vpack.c.bf16 %v330, %v330
    %v332 = vld [vmem:[#allocation8] sm:$0xf]
    %v333 = vld [vmem:[#allocation8 + $0x4] sm:$0xf]
    %v334 = vld [vmem:[#allocation8 + $0x8] sm:$0xf]
    %v335 = vld [vmem:[#allocation8 + $0xc] sm:$0xf]
    %v336 = vld [vmem:[#allocation8 + $0x10] sm:$0xf]
    %v337 = vld [vmem:[#allocation8 + $0x14] sm:$0xf]
    %v338 = vld [vmem:[#allocation8 + $0x18] sm:$0xf]
    %v339 = vld [vmem:[#allocation8 + $0x1c] sm:$0xf]
    %v340 = vld [vmem:[#allocation8 + $0x20] sm:$0xf]
    %v341 = vld [vmem:[#allocation8 + $0x24] sm:$0xf]
    %v342 = vld [vmem:[#allocation8 + $0x28] sm:$0xf]
    %v343 = vld [vmem:[#allocation8 + $0x2c] sm:$0xf]
    %v344 = vld [vmem:[#allocation8 + $0x30] sm:$0xf]
    %v345 = vld [vmem:[#allocation8 + $0x34] sm:$0xf]
    %v346 = vld [vmem:[#allocation8 + $0x38] sm:$0xf]
    %v347 = vld [vmem:[#allocation8 + $0x3c] sm:$0xf]
    %v348 = vld [vmem:[%s6] sm:$0x1]
    %v350 = vlaneseq
    %v351 = vshrl.u32 %v350, 7
    %v352 = vsub.s32 0, %v351
    %v353 = vrot.slane %v348, %v352
    %v371 = vunpack.c.l.b16 %v332
    %v372 = vunpack.c.l.b16 %v333
    %v373 = vunpack.c.l.b16 %v334
    %v374 = vunpack.c.l.b16 %v335
    %v375 = vunpack.c.l.b16 %v336
    %v376 = vunpack.c.l.b16 %v337
    %v377 = vunpack.c.l.b16 %v338
    %v378 = vunpack.c.l.b16 %v339
    %v379 = vunpack.c.l.b16 %v340
    %v380 = vunpack.c.l.b16 %v341
    %v381 = vunpack.c.l.b16 %v342
    %v382 = vunpack.c.l.b16 %v343
    %v383 = vunpack.c.l.b16 %v344
    %v384 = vunpack.c.l.b16 %v345
    %v385 = vunpack.c.l.b16 %v346
    %v386 = vunpack.c.l.b16 %v347
    %v387 = vpack.c.b16 %v372, %v371
    %v388 = vpack.c.b16 %v374, %v373
    %v389 = vpack.c.b16 %v376, %v375
    %v390 = vpack.c.b16 %v378, %v377
    %v391 = vpack.c.b16 %v380, %v379
    %v392 = vpack.c.b16 %v382, %v381
    %v393 = vpack.c.b16 %v384, %v383
    %v394 = vpack.c.b16 %v386, %v385
    %403 = vmatprep.subr.bf16.mxu0 0
    %404 = vmatpush1.bf16.msra.mxu0 %v394
    %405 = vmatprep.subr.bf16.mxu0 0
    %406 = vmatpush1.bf16.msra.mxu0 %v393
    %407 = vmatprep.subr.bf16.mxu0 0
    %408 = vmatpush1.bf16.msra.mxu0 %v392
    %409 = vmatprep.subr.bf16.mxu0 0
    %410 = vmatpush1.bf16.msra.mxu0 %v391
    %411 = vmatprep.subr.bf16.mxu0 0
    %412 = vmatpush1.bf16.msra.mxu0 %v390
    %413 = vmatprep.subr.bf16.mxu0 0
    %414 = vmatpush1.bf16.msra.mxu0 %v389
    %415 = vmatprep.subr.bf16.mxu0 0
    %416 = vmatpush1.bf16.msra.mxu0 %v388
    %417 = vmatprep.subr.bf16.mxu0 0
    %418 = vmatpush1.bf16.msra.mxu0 %v387
    %419 = vmatprep.subr.bf16.mxu0 0
    %420 = vmatpush2.bf16.msra.mxu0 0
    %421 = vmatprep.subr.bf16.mxu0 0
    %422 = vmatpush2.bf16.msra.mxu0 0
    %423 = vmatprep.subr.bf16.mxu0 0
    %424 = vmatpush2.bf16.msra.mxu0 0
    %425 = vmatprep.subr.bf16.mxu0 0
    %426 = vmatpush2.bf16.msra.mxu0 0
    %427 = vmatprep.subr.bf16.mxu0 0
    %428 = vmatpush2.bf16.msra.mxu0 0
    %429 = vmatprep.subr.bf16.mxu0 0
    %430 = vmatpush2.bf16.msra.mxu0 0
    %431 = vmatprep.subr.bf16.mxu0 0
    %432 = vmatpush2.bf16.msra.mxu0 0
    %433 = vmatprep.subr.bf16.mxu0 0
    %434 = vmatpush2.bf16.msra.mxu0 0
    %435 = vmatprep.mubr.bf16.mxu0 0
    %436 = vmatmul.mubr.bf16.gmra.mxu0 %v331
    %v437 = vpop.f32.mrf.mxu0
    %v438 = vadd.f32 %v353, %v437
    %v439 = vpop.f32.mrf.mxu0
    %v440 = vpop.f32.mrf.mxu0
    %v441 = vpop.f32.mrf.mxu0
    %442 = vdwg.mxu0
    %v443 = vadd.f32 %v213, %v438
    %v444 = vpack.c.bf16 %v443, %v443
    %s445 = scalar_lea.vmem [#allocation7], 64
    %v446 = vld [vmem:[%s445] sm:$0xf]
    %v447 = vld [vmem:[%s445 + $0x4] sm:$0xf]
    %v448 = vld [vmem:[%s445 + $0x8] sm:$0xf]
    %v449 = vld [vmem:[%s445 + $0xc] sm:$0xf]
    %v450 = vld [vmem:[%s445 + $0x10] sm:$0xf]
    %v451 = vld [vmem:[%s445 + $0x14] sm:$0xf]
    %v452 = vld [vmem:[%s445 + $0x18] sm:$0xf]
    %v453 = vld [vmem:[%s445 + $0x1c] sm:$0xf]
    %v454 = vld [vmem:[%s445 + $0x20] sm:$0xf]
    %v455 = vld [vmem:[%s445 + $0x24] sm:$0xf]
    %v456 = vld [vmem:[%s445 + $0x28] sm:$0xf]
    %v457 = vld [vmem:[%s445 + $0x2c] sm:$0xf]
    %v458 = vld [vmem:[%s445 + $0x30] sm:$0xf]
    %v459 = vld [vmem:[%s445 + $0x34] sm:$0xf]
    %v460 = vld [vmem:[%s445 + $0x38] sm:$0xf]
    %v461 = vld [vmem:[%s445 + $0x3c] sm:$0xf]
    %s462 = scalar_lea.vmem %s4, 1
    %v463 = vld [vmem:[%s462] sm:$0x1]
    %v465 = vlaneseq
    %v466 = vshrl.u32 %v465, 7
    %v467 = vsub.s32 0, %v466
    %v468 = vrot.slane %v463, %v467
    %v486 = vunpack.c.l.b16 %v446
    %v487 = vunpack.c.l.b16 %v447
    %v488 = vunpack.c.l.b16 %v448
    %v489 = vunpack.c.l.b16 %v449
    %v490 = vunpack.c.l.b16 %v450
    %v491 = vunpack.c.l.b16 %v451
    %v492 = vunpack.c.l.b16 %v452
    %v493 = vunpack.c.l.b16 %v453
    %v494 = vunpack.c.l.b16 %v454
    %v495 = vunpack.c.l.b16 %v455
    %v496 = vunpack.c.l.b16 %v456
    %v497 = vunpack.c.l.b16 %v457
    %v498 = vunpack.c.l.b16 %v458
    %v499 = vunpack.c.l.b16 %v459
    %v500 = vunpack.c.l.b16 %v460
    %v501 = vunpack.c.l.b16 %v461
    %v502 = vpack.c.b16 %v487, %v486
    %v503 = vpack.c.b16 %v489, %v488
    %v504 = vpack.c.b16 %v491, %v490
    %v505 = vpack.c.b16 %v493, %v492
    %v506 = vpack.c.b16 %v495, %v494
    %v507 = vpack.c.b16 %v497, %v496
    %v508 = vpack.c.b16 %v499, %v498
    %v509 = vpack.c.b16 %v501, %v500
    %518 = vmatprep.subr.bf16.mxu0 0
    %519 = vmatpush1.bf16.msra.mxu0 %v509
    %520 = vmatprep.subr.bf16.mxu0 0
    %521 = vmatpush1.bf16.msra.mxu0 %v508
    %522 = vmatprep.subr.bf16.mxu0 0
    %523 = vmatpush1.bf16.msra.mxu0 %v507
    %524 = vmatprep.subr.bf16.mxu0 0
    %525 = vmatpush1.bf16.msra.mxu0 %v506
    %526 = vmatprep.subr.bf16.mxu0 0
    %527 = vmatpush1.bf16.msra.mxu0 %v505
    %528 = vmatprep.subr.bf16.mxu0 0
    %529 = vmatpush1.bf16.msra.mxu0 %v504
    %530 = vmatprep.subr.bf16.mxu0 0
    %531 = vmatpush1.bf16.msra.mxu0 %v503
    %532 = vmatprep.subr.bf16.mxu0 0
    %533 = vmatpush1.bf16.msra.mxu0 %v502
    %534 = vmatprep.subr.bf16.mxu0 0
    %535 = vmatpush2.bf16.msra.mxu0 0
    %536 = vmatprep.subr.bf16.mxu0 0
    %537 = vmatpush2.bf16.msra.mxu0 0
    %538 = vmatprep.subr.bf16.mxu0 0
    %539 = vmatpush2.bf16.msra.mxu0 0
    %540 = vmatprep.subr.bf16.mxu0 0
    %541 = vmatpush2.bf16.msra.mxu0 0
    %542 = vmatprep.subr.bf16.mxu0 0
    %543 = vmatpush2.bf16.msra.mxu0 0
    %544 = vmatprep.subr.bf16.mxu0 0
    %545 = vmatpush2.bf16.msra.mxu0 0
    %546 = vmatprep.subr.bf16.mxu0 0
    %547 = vmatpush2.bf16.msra.mxu0 0
    %548 = vmatprep.subr.bf16.mxu0 0
    %549 = vmatpush2.bf16.msra.mxu0 0
    %550 = vmatprep.mubr.bf16.mxu0 0
    %551 = vmatmul.mubr.bf16.gmra.mxu0 %v444
    %v552 = vpop.f32.mrf.mxu0
    %v553 = vadd.f32 %v468, %v552
    %v554 = vpop.f32.mrf.mxu0
    %v555 = vpop.f32.mrf.mxu0
    %v556 = vpop.f32.mrf.mxu0
    %557 = vdwg.mxu0
    %v558 = vmax.f32 %v553, 0.0
    %v559 = vpack.c.bf16 %v558, %v558
    %s560 = scalar_lea.vmem [#allocation8], 64
    %v561 = vld [vmem:[%s560] sm:$0xf]
    %v562 = vld [vmem:[%s560 + $0x4] sm:$0xf]
    %v563 = vld [vmem:[%s560 + $0x8] sm:$0xf]
    %v564 = vld [vmem:[%s560 + $0xc] sm:$0xf]
    %v565 = vld [vmem:[%s560 + $0x10] sm:$0xf]
    %v566 = vld [vmem:[%s560 + $0x14] sm:$0xf]
    %v567 = vld [vmem:[%s560 + $0x18] sm:$0xf]
    %v568 = vld [vmem:[%s560 + $0x1c] sm:$0xf]
    %v569 = vld [vmem:[%s560 + $0x20] sm:$0xf]
    %v570 = vld [vmem:[%s560 + $0x24] sm:$0xf]
    %v571 = vld [vmem:[%s560 + $0x28] sm:$0xf]
    %v572 = vld [vmem:[%s560 + $0x2c] sm:$0xf]
    %v573 = vld [vmem:[%s560 + $0x30] sm:$0xf]
    %v574 = vld [vmem:[%s560 + $0x34] sm:$0xf]
    %v575 = vld [vmem:[%s560 + $0x38] sm:$0xf]
    %v576 = vld [vmem:[%s560 + $0x3c] sm:$0xf]
    %s577 = scalar_lea.vmem %s6, 1
    %v578 = vld [vmem:[%s577] sm:$0x1]
    %v580 = vlaneseq
    %v581 = vshrl.u32 %v580, 7
    %v582 = vsub.s32 0, %v581
    %v583 = vrot.slane %v578, %v582
    %v601 = vunpack.c.l.b16 %v561
    %v602 = vunpack.c.l.b16 %v562
    %v603 = vunpack.c.l.b16 %v563
    %v604 = vunpack.c.l.b16 %v564
    %v605 = vunpack.c.l.b16 %v565
    %v606 = vunpack.c.l.b16 %v566
    %v607 = vunpack.c.l.b16 %v567
    %v608 = vunpack.c.l.b16 %v568
    %v609 = vunpack.c.l.b16 %v569
    %v610 = vunpack.c.l.b16 %v570
    %v611 = vunpack.c.l.b16 %v571
    %v612 = vunpack.c.l.b16 %v572
    %v613 = vunpack.c.l.b16 %v573
    %v614 = vunpack.c.l.b16 %v574
    %v615 = vunpack.c.l.b16 %v575
    %v616 = vunpack.c.l.b16 %v576
    %v617 = vpack.c.b16 %v602, %v601
    %v618 = vpack.c.b16 %v604, %v603
    %v619 = vpack.c.b16 %v606, %v605
    %v620 = vpack.c.b16 %v608, %v607
    %v621 = vpack.c.b16 %v610, %v609
    %v622 = vpack.c.b16 %v612, %v611
    %v623 = vpack.c.b16 %v614, %v613
    %v624 = vpack.c.b16 %v616, %v615
    %633 = vmatprep.subr.bf16.mxu0 0
    %634 = vmatpush1.bf16.msra.mxu0 %v624
    %635 = vmatprep.subr.bf16.mxu0 0
    %636 = vmatpush1.bf16.msra.mxu0 %v623
    %637 = vmatprep.subr.bf16.mxu0 0
    %638 = vmatpush1.bf16.msra.mxu0 %v622
    %639 = vmatprep.subr.bf16.mxu0 0
    %640 = vmatpush1.bf16.msra.mxu0 %v621
    %641 = vmatprep.subr.bf16.mxu0 0
    %642 = vmatpush1.bf16.msra.mxu0 %v620
    %643 = vmatprep.subr.bf16.mxu0 0
    %644 = vmatpush1.bf16.msra.mxu0 %v619
    %645 = vmatprep.subr.bf16.mxu0 0
    %646 = vmatpush1.bf16.msra.mxu0 %v618
    %647 = vmatprep.subr.bf16.mxu0 0
    %648 = vmatpush1.bf16.msra.mxu0 %v617
    %649 = vmatprep.subr.bf16.mxu0 0
    %650 = vmatpush2.bf16.msra.mxu0 0
    %651 = vmatprep.subr.bf16.mxu0 0
    %652 = vmatpush2.bf16.msra.mxu0 0
    %653 = vmatprep.subr.bf16.mxu0 0
    %654 = vmatpush2.bf16.msra.mxu0 0
    %655 = vmatprep.subr.bf16.mxu0 0
    %656 = vmatpush2.bf16.msra.mxu0 0
    %657 = vmatprep.subr.bf16.mxu0 0
    %658 = vmatpush2.bf16.msra.mxu0 0
    %659 = vmatprep.subr.bf16.mxu0 0
    %660 = vmatpush2.bf16.msra.mxu0 0
    %661 = vmatprep.subr.bf16.mxu0 0
    %662 = vmatpush2.bf16.msra.mxu0 0
    %663 = vmatprep.subr.bf16.mxu0 0
    %664 = vmatpush2.bf16.msra.mxu0 0
    %665 = vmatprep.mubr.bf16.mxu0 0
    %666 = vmatmul.mubr.bf16.gmra.mxu0 %v559
    %v667 = vpop.f32.mrf.mxu0
    %v668 = vadd.f32 %v583, %v667
    %v669 = vpop.f32.mrf.mxu0
    %v670 = vpop.f32.mrf.mxu0
    %v671 = vpop.f32.mrf.mxu0
    %672 = vdwg.mxu0
    %v673 = vadd.f32 %v443, %v668
    %v674 = vld [vmem:[%s7] sm:$0x1]
    %v676 = vlaneseq
    %v677 = vshrl.u32 %v676, 7
    %v678 = vsub.s32 0, %v677
    %v679 = vrot.slane %v674, %v678
    %v681 = vmul.f32 %v673, %v679
    %v682 = vld [vmem:[%s8] sm:$0x1]
    %v684 = vlaneseq
    %v685 = vshrl.u32 %v684, 7
    %v686 = vsub.s32 0, %v685
    %v687 = vrot.slane %v682, %v686
    %v689 = vadd.f32 %v681, %v687
    %v690 = vmax.f32 %v689, 0.0
    %v691 = vpack.c.bf16 %v690, %v690
    %v692 = vld [vmem:[#allocation10] sm:$0xf]
    %v693 = vld [vmem:[#allocation10 + $0x4] sm:$0xf]
    %v694 = vld [vmem:[#allocation10 + $0x8] sm:$0xf]
    %v695 = vld [vmem:[#allocation10 + $0xc] sm:$0xf]
    %v696 = vld [vmem:[#allocation10 + $0x10] sm:$0xf]
    %v697 = vld [vmem:[#allocation10 + $0x14] sm:$0xf]
    %v698 = vld [vmem:[#allocation10 + $0x18] sm:$0xf]
    %v699 = vld [vmem:[#allocation10 + $0x1c] sm:$0xf]
    %v700 = vld [vmem:[#allocation10 + $0x20] sm:$0xf]
    %v701 = vld [vmem:[#allocation10 + $0x24] sm:$0xf]
    %v702 = vld [vmem:[#allocation10 + $0x28] sm:$0xf]
    %v703 = vld [vmem:[#allocation10 + $0x2c] sm:$0xf]
    %v704 = vld [vmem:[#allocation10 + $0x30] sm:$0xf]
    %v705 = vld [vmem:[#allocation10 + $0x34] sm:$0xf]
    %v706 = vld [vmem:[#allocation10 + $0x38] sm:$0xf]
    %v707 = vld [vmem:[#allocation10 + $0x3c] sm:$0xf]
    %v708 = vld [vmem:[%s10] sm:$0x1]
    %v710 = vlaneseq
    %v711 = vshrl.u32 %v710, 7
    %v712 = vsub.s32 0, %v711
    %v713 = vrot.slane %v708, %v712
    %v731 = vunpack.c.l.b16 %v692
    %v732 = vunpack.c.l.b16 %v693
    %v733 = vunpack.c.l.b16 %v694
    %v734 = vunpack.c.l.b16 %v695
    %v735 = vunpack.c.l.b16 %v696
    %v736 = vunpack.c.l.b16 %v697
    %v737 = vunpack.c.l.b16 %v698
    %v738 = vunpack.c.l.b16 %v699
    %v739 = vunpack.c.l.b16 %v700
    %v740 = vunpack.c.l.b16 %v701
    %v741 = vunpack.c.l.b16 %v702
    %v742 = vunpack.c.l.b16 %v703
    %v743 = vunpack.c.l.b16 %v704
    %v744 = vunpack.c.l.b16 %v705
    %v745 = vunpack.c.l.b16 %v706
    %v746 = vunpack.c.l.b16 %v707
    %v747 = vpack.c.b16 %v732, %v731
    %v748 = vpack.c.b16 %v734, %v733
    %v749 = vpack.c.b16 %v736, %v735
    %v750 = vpack.c.b16 %v738, %v737
    %v751 = vpack.c.b16 %v740, %v739
    %v752 = vpack.c.b16 %v742, %v741
    %v753 = vpack.c.b16 %v744, %v743
    %v754 = vpack.c.b16 %v746, %v745
    %763 = vmatprep.subr.bf16.mxu0 0
    %764 = vmatpush1.bf16.msra.mxu0 %v754
    %765 = vmatprep.subr.bf16.mxu0 0
    %766 = vmatpush1.bf16.msra.mxu0 %v753
    %767 = vmatprep.subr.bf16.mxu0 0
    %768 = vmatpush1.bf16.msra.mxu0 %v752
    %769 = vmatprep.subr.bf16.mxu0 0
    %770 = vmatpush1.bf16.msra.mxu0 %v751
    %771 = vmatprep.subr.bf16.mxu0 0
    %772 = vmatpush1.bf16.msra.mxu0 %v750
    %773 = vmatprep.subr.bf16.mxu0 0
    %774 = vmatpush1.bf16.msra.mxu0 %v749
    %775 = vmatprep.subr.bf16.mxu0 0
    %776 = vmatpush1.bf16.msra.mxu0 %v748
    %777 = vmatprep.subr.bf16.mxu0 0
    %778 = vmatpush1.bf16.msra.mxu0 %v747
    %779 = vmatprep.subr.bf16.mxu0 0
    %780 = vmatpush2.bf16.msra.mxu0 0
    %781 = vmatprep.subr.bf16.mxu0 0
    %782 = vmatpush2.bf16.msra.mxu0 0
    %783 = vmatprep.subr.bf16.mxu0 0
    %784 = vmatpush2.bf16.msra.mxu0 0
    %785 = vmatprep.subr.bf16.mxu0 0
    %786 = vmatpush2.bf16.msra.mxu0 0
    %787 = vmatprep.subr.bf16.mxu0 0
    %788 = vmatpush2.bf16.msra.mxu0 0
    %789 = vmatprep.subr.bf16.mxu0 0
    %790 = vmatpush2.bf16.msra.mxu0 0
    %791 = vmatprep.subr.bf16.mxu0 0
    %792 = vmatpush2.bf16.msra.mxu0 0
    %793 = vmatprep.subr.bf16.mxu0 0
    %794 = vmatpush2.bf16.msra.mxu0 0
    %795 = vmatprep.mubr.bf16.mxu0 0
    %796 = vmatmul.mubr.bf16.gmra.mxu0 %v691
    %v797 = vpop.f32.mrf.mxu0
    %v798 = vadd.f32 %v713, %v797
    %v799 = vpop.f32.mrf.mxu0
    %v800 = vpop.f32.mrf.mxu0
    %v801 = vpop.f32.mrf.mxu0
    %802 = vdwg.mxu0
    %803 = vst [vmem:[#allocation11] sm:$0xff] %v798
    // Predicated region
    $region66: #{tpu_custom_call.1} parent=1 // pred_check
      _
    $region67: #{tpu_custom_call.1} parent=1 // pred_check_branch
      %805 = sbr.rel (0) target = $region69
    $region68: #{tpu_custom_call.1} parent=1 // pred_region
      %s807 = ssub.s32 128, 128
      %808 = vsyncadd [#allocation4], %s807
      %s810 = sshll.u32 [#allocation11], 4
      %s811 = int_to_ptr.vmem [resolvable:$true] %s810
      %813 = dma.vmem_to_hbm [thread:$0]  %s811, 128, %s11, [#allocation4]
    $region69: #{tpu_custom_call.1} parent=1 // pred_fallthru
      _
    // Predicated region
    $region70: #{tpu_custom_call.1} parent=1 // pred_check
      _
    $region71: #{tpu_custom_call.1} parent=1 // pred_check_branch
      %815 = sbr.rel (0) target = $region73
    $region72: #{tpu_custom_call.1} parent=1 // pred_region
      %816 = dma.done [#allocation4], 128
    $region73: #{tpu_custom_call.1} parent=1 // pred_fallthru
      _
    %817 = vsyncpa [#allocation3], 1
    %818 = vsyncpa [#allocation6], 1
    %819 = vsyncpa [#allocation9], 1
    %820 = vsyncpa [#allocation4], 1

// kernel: tpu_custom_call.1
$region0: #{tpu_custom_call.1}
  #allocation0 [shape = 'u32[]', space=smem, size = 0x4, offset = 0x4, fixed_abs, tag = 'smem constant byte address 0x4 - core index']
  #allocation1 [shape = 'u32[144,128]{1,0:T(1,128)}', space=vmem, size = 0x12000, scoped, tag = 'internal scratch']
  %s0 = inlined_call_operand.hbm [shape: bf16[8,128], index: 0, kind: input, shape index: {}]
  %s1 = inlined_call_operand.hbm [shape: bf16[128,128], index: 1, kind: input, shape index: {}]
  %s2 = inlined_call_operand.vmem [shape: f32[1,128], index: 2, kind: input, shape index: {}]
  %s3 = inlined_call_operand.hbm [shape: bf16[2,128,128], index: 3, kind: input, shape index: {}]
  %s4 = inlined_call_operand.vmem [shape: f32[2,1,128], index: 4, kind: input, shape index: {}]
  %s5 = inlined_call_operand.hbm [shape: bf16[2,128,128], index: 5, kind: input, shape index: {}]
  %s6 = inlined_call_operand.vmem [shape: f32[2,1,128], index: 6, kind: input, shape index: {}]
  %s7 = inlined_call_operand.vmem [shape: f32[1,128], index: 7, kind: input, shape index: {}]
  %s8 = inlined_call_operand.vmem [shape: f32[1,128], index: 8, kind: input, shape index: {}]
  %s9 = inlined_call_operand.hbm [shape: bf16[128,128], index: 9, kind: input, shape index: {}]
  %s10 = inlined_call_operand.vmem [shape: f32[1,128], index: 10, kind: input, shape index: {}]
  %s11 = inlined_call_operand.hbm [shape: f32[8,128], index: 11, kind: output, shape index: {}]
  %s12 = sld [smem:[#allocation0]]
  $region74: #{tpu_custom_call.1} parent=0
    _
  %s14 = ssub.s32 1, %s12
  %s15 = scalar_select 0, %s14, %s12
  $region1: #{tpu_custom_call.1} parent=0
    #allocation2 [shape = 'u8[2048]{0}', space=vmem, size = 0x800, scoped, tag = 'input window, operand 0, single buffered']
    #allocation3 [shape = 's32[1]{0}', space=sflag, size = 0x4, scoped, tag = 'scoped memory for tpu_custom_call.1']
    #allocation4 [shape = 's32[1]{0}', space=sflag, size = 0x4, scoped, tag = 'scoped memory for tpu_custom_call.1']
    #allocation5 [shape = 'u8[32768]{0}', space=vmem, size = 0x8000, scoped, tag = 'input window, operand 1, single buffered']
    #allocation6 [shape = 's32[1]{0}', space=sflag, size = 0x4, scoped, tag = 'scoped memory for tpu_custom_call.1']
    #allocation7 [shape = 'u8[65536]{0}', space=vmem, size = 0x10000, scoped, tag = 'input window, operand 3, single buffered']
    #allocation8 [shape = 'u8[65536]{0}', space=vmem, size = 0x10000, scoped, tag = 'input window, operand 5, single buffered']
    #allocation9 [shape = 's32[1]{0}', space=sflag, size = 0x4, scoped, tag = 'scoped memory for tpu_custom_call.1']
    #allocation10 [shape = 'u8[32768]{0}', space=vmem, size = 0x8000, scoped, tag = 'input window, operand 9, single buffered']
    #allocation11 [shape = 'u8[4096]{0}', space=vmem, size = 0x1000, scoped, tag = 'output window, operand 0, single buffered']
    %16 = vsyncpa [#allocation3], 0
    %17 = vsyncpa [#allocation6], 0
    %18 = vsyncpa [#allocation9], 0
    %19 = vsyncpa [#allocation4], 0
    // Predicated region
    $region2: #{tpu_custom_call.1} parent=1 // pred_check
      _
    $region3: #{tpu_custom_call.1} parent=1 // pred_check_branch
      %21 = sbr.rel (0) target = $region5
    $region4: #{tpu_custom_call.1} parent=1 // pred_region
      %s23 = ssub.s32 64, 64
      %24 = vsyncadd [#allocation3], %s23
      %s26 = sshll.u32 [#allocation2], 4
      %s27 = int_to_ptr.vmem [resolvable:$true] %s26
      %29 = dma.hbm_to_vmem [thread:$0]  %s0, 64, %s27, [#allocation3]
    $region5: #{tpu_custom_call.1} parent=1 // pred_fallthru
      _
    // Predicated region
    $region6: #{tpu_custom_call.1} parent=1 // pred_check
      _
    $region7: #{tpu_custom_call.1} parent=1 // pred_check_branch
      %31 = sbr.rel (0) target = $region9
    $region8: #{tpu_custom_call.1} parent=1 // pred_region
      %s33 = ssub.s32 1024, 1024
      %34 = vsyncadd [#allocation6], %s33
      %s35 = sshll.u32 [#allocation5], 4
      %s36 = int_to_ptr.vmem [resolvable:$true] %s35
      %41 = dma.hbm_to_vmem [thread:$0]  %s1, 1024, %s36, [#allocation6], 64, 64, 4
    $region9: #{tpu_custom_call.1} parent=1 // pred_fallthru
      _
    // Predicated region
    $region10: #{tpu_custom_call.1} parent=1 // pred_check
      _
    $region11: #{tpu_custom_call.1} parent=1 // pred_check_branch
      %43 = sbr.rel (0) target = $region13
    $region12: #{tpu_custom_call.1} parent=1 // pred_region
      _
    $region13: #{tpu_custom_call.1} parent=1 // pred_fallthru
      _
    // Predicated region
    $region14: #{tpu_custom_call.1} parent=1 // pred_check
      _
    $region15: #{tpu_custom_call.1} parent=1 // pred_check_branch
      %45 = sbr.rel (0) target = $region17
    $region16: #{tpu_custom_call.1} parent=1 // pred_region
      %s47 = ssub.s32 2048, 2048
      %48 = vsyncadd [#allocation6], %s47
      %s49 = sshll.u32 [#allocation7], 4
      %s50 = int_to_ptr.vmem [resolvable:$true] %s49
      %55 = dma.hbm_to_vmem [thread:$0]  %s3, 2048, %s50, [#allocation6], 64, 64, 4
    $region17: #{tpu_custom_call.1} parent=1 // pred_fallthru
      _
    // Predicated region
    $region18: #{tpu_custom_call.1} parent=1 // pred_check
      _
    $region19: #{tpu_custom_call.1} parent=1 // pred_check_branch
      %57 = sbr.rel (0) target = $region21
    $region20: #{tpu_custom_call.1} parent=1 // pred_region
      _
    $region21: #{tpu_custom_call.1} parent=1 // pred_fallthru
      _
    // Predicated region
    $region22: #{tpu_custom_call.1} parent=1 // pred_check
      _
    $region23: #{tpu_custom_call.1} parent=1 // pred_check_branch
      %59 = sbr.rel (0) target = $region25
    $region24: #{tpu_custom_call.1} parent=1 // pred_region
      %s61 = ssub.s32 2048, 2048
      %62 = vsyncadd [#allocation9], %s61
      %s63 = sshll.u32 [#allocation8], 4
      %s64 = int_to_ptr.vmem [resolvable:$true] %s63
      %69 = dma.hbm_to_vmem [thread:$0]  %s5, 2048, %s64, [#allocation9], 64, 64, 4
    $region25: #{tpu_custom_call.1} parent=1 // pred_fallthru
      _
    // Predicated region
    $region26: #{tpu_custom_call.1} parent=1 // pred_check
      _
    $region27: #{tpu_custom_call.1} parent=1 // pred_check_branch
      %71 = sbr.rel (0) target = $region29
    $region28: #{tpu_custom_call.1} parent=1 // pred_region
      _
    $region29: #{tpu_custom_call.1} parent=1 // pred_fallthru
      _
    // Predicated region
    $region30: #{tpu_custom_call.1} parent=1 // pred_check
      _
    $region31: #{tpu_custom_call.1} parent=1 // pred_check_branch
      %73 = sbr.rel (0) target = $region33
    $region32: #{tpu_custom_call.1} parent=1 // pred_region
      _
    $region33: #{tpu_custom_call.1} parent=1 // pred_fallthru
      _
    // Predicated region
    $region34: #{tpu_custom_call.1} parent=1 // pred_check
      _
    $region35: #{tpu_custom_call.1} parent=1 // pred_check_branch
      %75 = sbr.rel (0) target = $region37
    $region36: #{tpu_custom_call.1} parent=1 // pred_region
      _
    $region37: #{tpu_custom_call.1} parent=1 // pred_fallthru
      _
    // Predicated region
    $region38: #{tpu_custom_call.1} parent=1 // pred_check
      _
    $region39: #{tpu_custom_call.1} parent=1 // pred_check_branch
      %77 = sbr.rel (0) target = $region41
    $region40: #{tpu_custom_call.1} parent=1 // pred_region
      %s79 = ssub.s32 1024, 1024
      %80 = vsyncadd [#allocation9], %s79
      %s81 = sshll.u32 [#allocation10], 4
      %s82 = int_to_ptr.vmem [resolvable:$true] %s81
      %87 = dma.hbm_to_vmem [thread:$0]  %s9, 1024, %s82, [#allocation9], 64, 64, 4
    $region41: #{tpu_custom_call.1} parent=1 // pred_fallthru
      _
    // Predicated region
    $region42: #{tpu_custom_call.1} parent=1 // pred_check
      _
    $region43: #{tpu_custom_call.1} parent=1 // pred_check_branch
      %89 = sbr.rel (0) target = $region45
    $region44: #{tpu_custom_call.1} parent=1 // pred_region
      _
    $region45: #{tpu_custom_call.1} parent=1 // pred_fallthru
      _
    // Predicated region
    $region46: #{tpu_custom_call.1} parent=1 // pred_check
      _
    $region47: #{tpu_custom_call.1} parent=1 // pred_check_branch
      %91 = sbr.rel (0) target = $region49
    $region48: #{tpu_custom_call.1} parent=1 // pred_region
      %92 = dma.done [#allocation3], 64
    $region49: #{tpu_custom_call.1} parent=1 // pred_fallthru
      _
    // Predicated region
    $region50: #{tpu_custom_call.1} parent=1 // pred_check
      _
    $region51: #{tpu_custom_call.1} parent=1 // pred_check_branch
      %94 = sbr.rel (0) target = $region53
    $region52: #{tpu_custom_call.1} parent=1 // pred_region
      %95 = dma.done [#allocation6], 1024
    $region53: #{tpu_custom_call.1} parent=1 // pred_fallthru
      _
    // Predicated region
    $region54: #{tpu_custom_call.1} parent=1 // pred_check
      _
    $region55: #{tpu_custom_call.1} parent=1 // pred_check_branch
      %97 = sbr.rel (0) target = $region57
    $region56: #{tpu_custom_call.1} parent=1 // pred_region
      %98 = dma.done [#allocation6], 2048
    $region57: #{tpu_custom_call.1} parent=1 // pred_fallthru
      _
    // Predicated region
    $region58: #{tpu_custom_call.1} parent=1 // pred_check
      _
    $region59: #{tpu_custom_call.1} parent=1 // pred_check_branch
      %100 = sbr.rel (0) target = $region61
    $region60: #{tpu_custom_call.1} parent=1 // pred_region
      %101 = dma.done [#allocation9], 2048
    $region61: #{tpu_custom_call.1} parent=1 // pred_fallthru
      _
    // Predicated region
    $region62: #{tpu_custom_call.1} parent=1 // pred_check
      _
    $region63: #{tpu_custom_call.1} parent=1 // pred_check_branch
      %103 = sbr.rel (0) target = $region65
    $region64: #{tpu_custom_call.1} parent=1 // pred_region
      %104 = dma.done [#allocation9], 1024
    $region65: #{tpu_custom_call.1} parent=1 // pred_fallthru
      _
    %v106 = vld [vmem:[#allocation2] sm:$0xf]
    %v107 = vld [vmem:[#allocation5] sm:$0xf]
    %v108 = vld [vmem:[#allocation5 + $0x4] sm:$0xf]
    %v109 = vld [vmem:[#allocation5 + $0x8] sm:$0xf]
    %v110 = vld [vmem:[#allocation5 + $0xc] sm:$0xf]
    %v111 = vld [vmem:[#allocation5 + $0x10] sm:$0xf]
    %v112 = vld [vmem:[#allocation5 + $0x14] sm:$0xf]
    %v113 = vld [vmem:[#allocation5 + $0x18] sm:$0xf]
    %v114 = vld [vmem:[#allocation5 + $0x1c] sm:$0xf]
    %v115 = vld [vmem:[#allocation5 + $0x20] sm:$0xf]
    %v116 = vld [vmem:[#allocation5 + $0x24] sm:$0xf]
    %v117 = vld [vmem:[#allocation5 + $0x28] sm:$0xf]
    %v118 = vld [vmem:[#allocation5 + $0x2c] sm:$0xf]
    %v119 = vld [vmem:[#allocation5 + $0x30] sm:$0xf]
    %v120 = vld [vmem:[#allocation5 + $0x34] sm:$0xf]
    %v121 = vld [vmem:[#allocation5 + $0x38] sm:$0xf]
    %v122 = vld [vmem:[#allocation5 + $0x3c] sm:$0xf]
    %v123 = vld [vmem:[%s2] sm:$0x1]
    %v125 = vlaneseq
    %v126 = vshrl.u32 %v125, 7
    %v127 = vsub.s32 0, %v126
    %v128 = vrot.slane %v123, %v127
    %v146 = vunpack.c.l.b16 %v107
    %v147 = vunpack.c.l.b16 %v108
    %v148 = vunpack.c.l.b16 %v109
    %v149 = vunpack.c.l.b16 %v110
    %v150 = vunpack.c.l.b16 %v111
    %v151 = vunpack.c.l.b16 %v112
    %v152 = vunpack.c.l.b16 %v113
    %v153 = vunpack.c.l.b16 %v114
    %v154 = vunpack.c.l.b16 %v115
    %v155 = vunpack.c.l.b16 %v116
    %v156 = vunpack.c.l.b16 %v117
    %v157 = vunpack.c.l.b16 %v118
    %v158 = vunpack.c.l.b16 %v119
    %v159 = vunpack.c.l.b16 %v120
    %v160 = vunpack.c.l.b16 %v121
    %v161 = vunpack.c.l.b16 %v122
    %v162 = vpack.c.b16 %v147, %v146
    %v163 = vpack.c.b16 %v149, %v148
    %v164 = vpack.c.b16 %v151, %v150
    %v165 = vpack.c.b16 %v153, %v152
    %v166 = vpack.c.b16 %v155, %v154
    %v167 = vpack.c.b16 %v157, %v156
    %v168 = vpack.c.b16 %v159, %v158
    %v169 = vpack.c.b16 %v161, %v160
    %178 = vmatprep.subr.bf16.mxu0 0
    %179 = vmatpush1.bf16.msra.mxu0 %v169
    %180 = vmatprep.subr.bf16.mxu0 0
    %181 = vmatpush1.bf16.msra.mxu0 %v168
    %182 = vmatprep.subr.bf16.mxu0 0
    %183 = vmatpush1.bf16.msra.mxu0 %v167
    %184 = vmatprep.subr.bf16.mxu0 0
    %185 = vmatpush1.bf16.msra.mxu0 %v166
    %186 = vmatprep.subr.bf16.mxu0 0
    %187 = vmatpush1.bf16.msra.mxu0 %v165
    %188 = vmatprep.subr.bf16.mxu0 0
    %189 = vmatpush1.bf16.msra.mxu0 %v164
    %190 = vmatprep.subr.bf16.mxu0 0
    %191 = vmatpush1.bf16.msra.mxu0 %v163
    %192 = vmatprep.subr.bf16.mxu0 0
    %193 = vmatpush1.bf16.msra.mxu0 %v162
    %194 = vmatprep.subr.bf16.mxu0 0
    %195 = vmatpush2.bf16.msra.mxu0 0
    %196 = vmatprep.subr.bf16.mxu0 0
    %197 = vmatpush2.bf16.msra.mxu0 0
    %198 = vmatprep.subr.bf16.mxu0 0
    %199 = vmatpush2.bf16.msra.mxu0 0
    %200 = vmatprep.subr.bf16.mxu0 0
    %201 = vmatpush2.bf16.msra.mxu0 0
    %202 = vmatprep.subr.bf16.mxu0 0
    %203 = vmatpush2.bf16.msra.mxu0 0
    %204 = vmatprep.subr.bf16.mxu0 0
    %205 = vmatpush2.bf16.msra.mxu0 0
    %206 = vmatprep.subr.bf16.mxu0 0
    %207 = vmatpush2.bf16.msra.mxu0 0
    %208 = vmatprep.subr.bf16.mxu0 0
    %209 = vmatpush2.bf16.msra.mxu0 0
    %210 = vmatprep.mubr.bf16.mxu0 0
    %211 = vmatmul.mubr.bf16.gmra.mxu0 %v106
    %v212 = vpop.f32.mrf.mxu0
    %v213 = vadd.f32 %v128, %v212
    %v214 = vpop.f32.mrf.mxu0
    %v215 = vpop.f32.mrf.mxu0
    %v216 = vpop.f32.mrf.mxu0
    %217 = vdwg.mxu0
    %v218 = vpack.c.bf16 %v213, %v213
    %v219 = vld [vmem:[#allocation7] sm:$0xf]
    %v220 = vld [vmem:[#allocation7 + $0x4] sm:$0xf]
    %v221 = vld [vmem:[#allocation7 + $0x8] sm:$0xf]
    %v222 = vld [vmem:[#allocation7 + $0xc] sm:$0xf]
    %v223 = vld [vmem:[#allocation7 + $0x10] sm:$0xf]
    %v224 = vld [vmem:[#allocation7 + $0x14] sm:$0xf]
    %v225 = vld [vmem:[#allocation7 + $0x18] sm:$0xf]
    %v226 = vld [vmem:[#allocation7 + $0x1c] sm:$0xf]
    %v227 = vld [vmem:[#allocation7 + $0x20] sm:$0xf]
    %v228 = vld [vmem:[#allocation7 + $0x24] sm:$0xf]
    %v229 = vld [vmem:[#allocation7 + $0x28] sm:$0xf]
    %v230 = vld [vmem:[#allocation7 + $0x2c] sm:$0xf]
    %v231 = vld [vmem:[#allocation7 + $0x30] sm:$0xf]
    %v232 = vld [vmem:[#allocation7 + $0x34] sm:$0xf]
    %v233 = vld [vmem:[#allocation7 + $0x38] sm:$0xf]
    %v234 = vld [vmem:[#allocation7 + $0x3c] sm:$0xf]
    %v235 = vld [vmem:[%s4] sm:$0x1]
    %v237 = vlaneseq
    %v238 = vshrl.u32 %v237, 7
    %v239 = vsub.s32 0, %v238
    %v240 = vrot.slane %v235, %v239
    %v258 = vunpack.c.l.b16 %v219
    %v259 = vunpack.c.l.b16 %v220
    %v260 = vunpack.c.l.b16 %v221
    %v261 = vunpack.c.l.b16 %v222
    %v262 = vunpack.c.l.b16 %v223
    %v263 = vunpack.c.l.b16 %v224
    %v264 = vunpack.c.l.b16 %v225
    %v265 = vunpack.c.l.b16 %v226
    %v266 = vunpack.c.l.b16 %v227
    %v267 = vunpack.c.l.b16 %v228
    %v268 = vunpack.c.l.b16 %v229
    %v269 = vunpack.c.l.b16 %v230
    %v270 = vunpack.c.l.b16 %v231
    %v271 = vunpack.c.l.b16 %v232
    %v272 = vunpack.c.l.b16 %v233
    %v273 = vunpack.c.l.b16 %v234
    %v274 = vpack.c.b16 %v259, %v258
    %v275 = vpack.c.b16 %v261, %v260
    %v276 = vpack.c.b16 %v263, %v262
    %v277 = vpack.c.b16 %v265, %v264
    %v278 = vpack.c.b16 %v267, %v266
    %v279 = vpack.c.b16 %v269, %v268
    %v280 = vpack.c.b16 %v271, %v270
    %v281 = vpack.c.b16 %v273, %v272
    %290 = vmatprep.subr.bf16.mxu0 0
    %291 = vmatpush1.bf16.msra.mxu0 %v281
    %292 = vmatprep.subr.bf16.mxu0 0
    %293 = vmatpush1.bf16.msra.mxu0 %v280
    %294 = vmatprep.subr.bf16.mxu0 0
    %295 = vmatpush1.bf16.msra.mxu0 %v279
    %296 = vmatprep.subr.bf16.mxu0 0
    %297 = vmatpush1.bf16.msra.mxu0 %v278
    %298 = vmatprep.subr.bf16.mxu0 0
    %299 = vmatpush1.bf16.msra.mxu0 %v277
    %300 = vmatprep.subr.bf16.mxu0 0
    %301 = vmatpush1.bf16.msra.mxu0 %v276
    %302 = vmatprep.subr.bf16.mxu0 0
    %303 = vmatpush1.bf16.msra.mxu0 %v275
    %304 = vmatprep.subr.bf16.mxu0 0
    %305 = vmatpush1.bf16.msra.mxu0 %v274
    %306 = vmatprep.subr.bf16.mxu0 0
    %307 = vmatpush2.bf16.msra.mxu0 0
    %308 = vmatprep.subr.bf16.mxu0 0
    %309 = vmatpush2.bf16.msra.mxu0 0
    %310 = vmatprep.subr.bf16.mxu0 0
    %311 = vmatpush2.bf16.msra.mxu0 0
    %312 = vmatprep.subr.bf16.mxu0 0
    %313 = vmatpush2.bf16.msra.mxu0 0
    %314 = vmatprep.subr.bf16.mxu0 0
    %315 = vmatpush2.bf16.msra.mxu0 0
    %316 = vmatprep.subr.bf16.mxu0 0
    %317 = vmatpush2.bf16.msra.mxu0 0
    %318 = vmatprep.subr.bf16.mxu0 0
    %319 = vmatpush2.bf16.msra.mxu0 0
    %320 = vmatprep.subr.bf16.mxu0 0
    %321 = vmatpush2.bf16.msra.mxu0 0
    %322 = vmatprep.mubr.bf16.mxu0 0
    %323 = vmatmul.mubr.bf16.gmra.mxu0 %v218
    %v324 = vpop.f32.mrf.mxu0
    %v325 = vadd.f32 %v240, %v324
    %v326 = vpop.f32.mrf.mxu0
    %v327 = vpop.f32.mrf.mxu0
    %v328 = vpop.f32.mrf.mxu0
    %329 = vdwg.mxu0
    %v330 = vmax.f32 %v325, 0.0
    %v331 = vpack.c.bf16 %v330, %v330
    %v332 = vld [vmem:[#allocation8] sm:$0xf]
    %v333 = vld [vmem:[#allocation8 + $0x4] sm:$0xf]
    %v334 = vld [vmem:[#allocation8 + $0x8] sm:$0xf]
    %v335 = vld [vmem:[#allocation8 + $0xc] sm:$0xf]
    %v336 = vld [vmem:[#allocation8 + $0x10] sm:$0xf]
    %v337 = vld [vmem:[#allocation8 + $0x14] sm:$0xf]
    %v338 = vld [vmem:[#allocation8 + $0x18] sm:$0xf]
    %v339 = vld [vmem:[#allocation8 + $0x1c] sm:$0xf]
    %v340 = vld [vmem:[#allocation8 + $0x20] sm:$0xf]
    %v341 = vld [vmem:[#allocation8 + $0x24] sm:$0xf]
    %v342 = vld [vmem:[#allocation8 + $0x28] sm:$0xf]
    %v343 = vld [vmem:[#allocation8 + $0x2c] sm:$0xf]
    %v344 = vld [vmem:[#allocation8 + $0x30] sm:$0xf]
    %v345 = vld [vmem:[#allocation8 + $0x34] sm:$0xf]
    %v346 = vld [vmem:[#allocation8 + $0x38] sm:$0xf]
    %v347 = vld [vmem:[#allocation8 + $0x3c] sm:$0xf]
    %v348 = vld [vmem:[%s6] sm:$0x1]
    %v350 = vlaneseq
    %v351 = vshrl.u32 %v350, 7
    %v352 = vsub.s32 0, %v351
    %v353 = vrot.slane %v348, %v352
    %v371 = vunpack.c.l.b16 %v332
    %v372 = vunpack.c.l.b16 %v333
    %v373 = vunpack.c.l.b16 %v334
    %v374 = vunpack.c.l.b16 %v335
    %v375 = vunpack.c.l.b16 %v336
    %v376 = vunpack.c.l.b16 %v337
    %v377 = vunpack.c.l.b16 %v338
    %v378 = vunpack.c.l.b16 %v339
    %v379 = vunpack.c.l.b16 %v340
    %v380 = vunpack.c.l.b16 %v341
    %v381 = vunpack.c.l.b16 %v342
    %v382 = vunpack.c.l.b16 %v343
    %v383 = vunpack.c.l.b16 %v344
    %v384 = vunpack.c.l.b16 %v345
    %v385 = vunpack.c.l.b16 %v346
    %v386 = vunpack.c.l.b16 %v347
    %v387 = vpack.c.b16 %v372, %v371
    %v388 = vpack.c.b16 %v374, %v373
    %v389 = vpack.c.b16 %v376, %v375
    %v390 = vpack.c.b16 %v378, %v377
    %v391 = vpack.c.b16 %v380, %v379
    %v392 = vpack.c.b16 %v382, %v381
    %v393 = vpack.c.b16 %v384, %v383
    %v394 = vpack.c.b16 %v386, %v385
    %403 = vmatprep.subr.bf16.mxu0 0
    %404 = vmatpush1.bf16.msra.mxu0 %v394
    %405 = vmatprep.subr.bf16.mxu0 0
    %406 = vmatpush1.bf16.msra.mxu0 %v393
    %407 = vmatprep.subr.bf16.mxu0 0
    %408 = vmatpush1.bf16.msra.mxu0 %v392
    %409 = vmatprep.subr.bf16.mxu0 0
    %410 = vmatpush1.bf16.msra.mxu0 %v391
    %411 = vmatprep.subr.bf16.mxu0 0
    %412 = vmatpush1.bf16.msra.mxu0 %v390
    %413 = vmatprep.subr.bf16.mxu0 0
    %414 = vmatpush1.bf16.msra.mxu0 %v389
    %415 = vmatprep.subr.bf16.mxu0 0
    %416 = vmatpush1.bf16.msra.mxu0 %v388
    %417 = vmatprep.subr.bf16.mxu0 0
    %418 = vmatpush1.bf16.msra.mxu0 %v387
    %419 = vmatprep.subr.bf16.mxu0 0
    %420 = vmatpush2.bf16.msra.mxu0 0
    %421 = vmatprep.subr.bf16.mxu0 0
    %422 = vmatpush2.bf16.msra.mxu0 0
    %423 = vmatprep.subr.bf16.mxu0 0
    %424 = vmatpush2.bf16.msra.mxu0 0
    %425 = vmatprep.subr.bf16.mxu0 0
    %426 = vmatpush2.bf16.msra.mxu0 0
    %427 = vmatprep.subr.bf16.mxu0 0
    %428 = vmatpush2.bf16.msra.mxu0 0
    %429 = vmatprep.subr.bf16.mxu0 0
    %430 = vmatpush2.bf16.msra.mxu0 0
    %431 = vmatprep.subr.bf16.mxu0 0
    %432 = vmatpush2.bf16.msra.mxu0 0
    %433 = vmatprep.subr.bf16.mxu0 0
    %434 = vmatpush2.bf16.msra.mxu0 0
    %435 = vmatprep.mubr.bf16.mxu0 0
    %436 = vmatmul.mubr.bf16.gmra.mxu0 %v331
    %v437 = vpop.f32.mrf.mxu0
    %v438 = vadd.f32 %v353, %v437
    %v439 = vpop.f32.mrf.mxu0
    %v440 = vpop.f32.mrf.mxu0
    %v441 = vpop.f32.mrf.mxu0
    %442 = vdwg.mxu0
    %v443 = vadd.f32 %v213, %v438
    %v444 = vpack.c.bf16 %v443, %v443
    %s445 = scalar_lea.vmem [#allocation7], 64
    %v446 = vld [vmem:[%s445] sm:$0xf]
    %v447 = vld [vmem:[%s445 + $0x4] sm:$0xf]
    %v448 = vld [vmem:[%s445 + $0x8] sm:$0xf]
    %v449 = vld [vmem:[%s445 + $0xc] sm:$0xf]
    %v450 = vld [vmem:[%s445 + $0x10] sm:$0xf]
    %v451 = vld [vmem:[%s445 + $0x14] sm:$0xf]
    %v452 = vld [vmem:[%s445 + $0x18] sm:$0xf]
    %v453 = vld [vmem:[%s445 + $0x1c] sm:$0xf]
    %v454 = vld [vmem:[%s445 + $0x20] sm:$0xf]
    %v455 = vld [vmem:[%s445 + $0x24] sm:$0xf]
    %v456 = vld [vmem:[%s445 + $0x28] sm:$0xf]
    %v457 = vld [vmem:[%s445 + $0x2c] sm:$0xf]
    %v458 = vld [vmem:[%s445 + $0x30] sm:$0xf]
    %v459 = vld [vmem:[%s445 + $0x34] sm:$0xf]
    %v460 = vld [vmem:[%s445 + $0x38] sm:$0xf]
    %v461 = vld [vmem:[%s445 + $0x3c] sm:$0xf]
    %s462 = scalar_lea.vmem %s4, 1
    %v463 = vld [vmem:[%s462] sm:$0x1]
    %v465 = vlaneseq
    %v466 = vshrl.u32 %v465, 7
    %v467 = vsub.s32 0, %v466
    %v468 = vrot.slane %v463, %v467
    %v486 = vunpack.c.l.b16 %v446
    %v487 = vunpack.c.l.b16 %v447
    %v488 = vunpack.c.l.b16 %v448
    %v489 = vunpack.c.l.b16 %v449
    %v490 = vunpack.c.l.b16 %v450
    %v491 = vunpack.c.l.b16 %v451
    %v492 = vunpack.c.l.b16 %v452
    %v493 = vunpack.c.l.b16 %v453
    %v494 = vunpack.c.l.b16 %v454
    %v495 = vunpack.c.l.b16 %v455
    %v496 = vunpack.c.l.b16 %v456
    %v497 = vunpack.c.l.b16 %v457
    %v498 = vunpack.c.l.b16 %v458
    %v499 = vunpack.c.l.b16 %v459
    %v500 = vunpack.c.l.b16 %v460
    %v501 = vunpack.c.l.b16 %v461
    %v502 = vpack.c.b16 %v487, %v486
    %v503 = vpack.c.b16 %v489, %v488
    %v504 = vpack.c.b16 %v491, %v490
    %v505 = vpack.c.b16 %v493, %v492
    %v506 = vpack.c.b16 %v495, %v494
    %v507 = vpack.c.b16 %v497, %v496
    %v508 = vpack.c.b16 %v499, %v498
    %v509 = vpack.c.b16 %v501, %v500
    %518 = vmatprep.subr.bf16.mxu0 0
    %519 = vmatpush1.bf16.msra.mxu0 %v509
    %520 = vmatprep.subr.bf16.mxu0 0
    %521 = vmatpush1.bf16.msra.mxu0 %v508
    %522 = vmatprep.subr.bf16.mxu0 0
    %523 = vmatpush1.bf16.msra.mxu0 %v507
    %524 = vmatprep.subr.bf16.mxu0 0
    %525 = vmatpush1.bf16.msra.mxu0 %v506
    %526 = vmatprep.subr.bf16.mxu0 0
    %527 = vmatpush1.bf16.msra.mxu0 %v505
    %528 = vmatprep.subr.bf16.mxu0 0
    %529 = vmatpush1.bf16.msra.mxu0 %v504
    %530 = vmatprep.subr.bf16.mxu0 0
    %531 = vmatpush1.bf16.msra.mxu0 %v503
    %532 = vmatprep.subr.bf16.mxu0 0
    %533 = vmatpush1.bf16.msra.mxu0 %v502
    %534 = vmatprep.subr.bf16.mxu0 0
    %535 = vmatpush2.bf16.msra.mxu0 0
    %536 = vmatprep.subr.bf16.mxu0 0
    %537 = vmatpush2.bf16.msra.mxu0 0
    %538 = vmatprep.subr.bf16.mxu0 0
    %539 = vmatpush2.bf16.msra.mxu0 0
    %540 = vmatprep.subr.bf16.mxu0 0
    %541 = vmatpush2.bf16.msra.mxu0 0
    %542 = vmatprep.subr.bf16.mxu0 0
    %543 = vmatpush2.bf16.msra.mxu0 0
    %544 = vmatprep.subr.bf16.mxu0 0
    %545 = vmatpush2.bf16.msra.mxu0 0
    %546 = vmatprep.subr.bf16.mxu0 0
    %547 = vmatpush2.bf16.msra.mxu0 0
    %548 = vmatprep.subr.bf16.mxu0 0
    %549 = vmatpush2.bf16.msra.mxu0 0
    %550 = vmatprep.mubr.bf16.mxu0 0
    %551 = vmatmul.mubr.bf16.gmra.mxu0 %v444
    %v552 = vpop.f32.mrf.mxu0
    %v553 = vadd.f32 %v468, %v552
    %v554 = vpop.f32.mrf.mxu0
    %v555 = vpop.f32.mrf.mxu0
    %v556 = vpop.f32.mrf.mxu0
    %557 = vdwg.mxu0
    %v558 = vmax.f32 %v553, 0.0
    %v559 = vpack.c.bf16 %v558, %v558
    %s560 = scalar_lea.vmem [#allocation8], 64
    %v561 = vld [vmem:[%s560] sm:$0xf]
    %v562 = vld [vmem:[%s560 + $0x4] sm:$0xf]
    %v563 = vld [vmem:[%s560 + $0x8] sm:$0xf]
    %v564 = vld [vmem:[%s560 + $0xc] sm:$0xf]
    %v565 = vld [vmem:[%s560 + $0x10] sm:$0xf]
    %v566 = vld [vmem:[%s560 + $0x14] sm:$0xf]
    %v567 = vld [vmem:[%s560 + $0x18] sm:$0xf]
    %v568 = vld [vmem:[%s560 + $0x1c] sm:$0xf]
    %v569 = vld [vmem:[%s560 + $0x20] sm:$0xf]
    %v570 = vld [vmem:[%s560 + $0x24] sm:$0xf]
    %v571 = vld [vmem:[%s560 + $0x28] sm:$0xf]
    %v572 = vld [vmem:[%s560 + $0x2c] sm:$0xf]
    %v573 = vld [vmem:[%s560 + $0x30] sm:$0xf]
    %v574 = vld [vmem:[%s560 + $0x34] sm:$0xf]
    %v575 = vld [vmem:[%s560 + $0x38] sm:$0xf]
    %v576 = vld [vmem:[%s560 + $0x3c] sm:$0xf]
    %s577 = scalar_lea.vmem %s6, 1
    %v578 = vld [vmem:[%s577] sm:$0x1]
    %v580 = vlaneseq
    %v581 = vshrl.u32 %v580, 7
    %v582 = vsub.s32 0, %v581
    %v583 = vrot.slane %v578, %v582
    %v601 = vunpack.c.l.b16 %v561
    %v602 = vunpack.c.l.b16 %v562
    %v603 = vunpack.c.l.b16 %v563
    %v604 = vunpack.c.l.b16 %v564
    %v605 = vunpack.c.l.b16 %v565
    %v606 = vunpack.c.l.b16 %v566
    %v607 = vunpack.c.l.b16 %v567
    %v608 = vunpack.c.l.b16 %v568
    %v609 = vunpack.c.l.b16 %v569
    %v610 = vunpack.c.l.b16 %v570
    %v611 = vunpack.c.l.b16 %v571
    %v612 = vunpack.c.l.b16 %v572
    %v613 = vunpack.c.l.b16 %v573
    %v614 = vunpack.c.l.b16 %v574
    %v615 = vunpack.c.l.b16 %v575
    %v616 = vunpack.c.l.b16 %v576
    %v617 = vpack.c.b16 %v602, %v601
    %v618 = vpack.c.b16 %v604, %v603
    %v619 = vpack.c.b16 %v606, %v605
    %v620 = vpack.c.b16 %v608, %v607
    %v621 = vpack.c.b16 %v610, %v609
    %v622 = vpack.c.b16 %v612, %v611
    %v623 = vpack.c.b16 %v614, %v613
    %v624 = vpack.c.b16 %v616, %v615
    %633 = vmatprep.subr.bf16.mxu0 0
    %634 = vmatpush1.bf16.msra.mxu0 %v624
    %635 = vmatprep.subr.bf16.mxu0 0
    %636 = vmatpush1.bf16.msra.mxu0 %v623
    %637 = vmatprep.subr.bf16.mxu0 0
    %638 = vmatpush1.bf16.msra.mxu0 %v622
    %639 = vmatprep.subr.bf16.mxu0 0
    %640 = vmatpush1.bf16.msra.mxu0 %v621
    %641 = vmatprep.subr.bf16.mxu0 0
    %642 = vmatpush1.bf16.msra.mxu0 %v620
    %643 = vmatprep.subr.bf16.mxu0 0
    %644 = vmatpush1.bf16.msra.mxu0 %v619
    %645 = vmatprep.subr.bf16.mxu0 0
    %646 = vmatpush1.bf16.msra.mxu0 %v618
    %647 = vmatprep.subr.bf16.mxu0 0
    %648 = vmatpush1.bf16.msra.mxu0 %v617
    %649 = vmatprep.subr.bf16.mxu0 0
    %650 = vmatpush2.bf16.msra.mxu0 0
    %651 = vmatprep.subr.bf16.mxu0 0
    %652 = vmatpush2.bf16.msra.mxu0 0
    %653 = vmatprep.subr.bf16.mxu0 0
    %654 = vmatpush2.bf16.msra.mxu0 0
    %655 = vmatprep.subr.bf16.mxu0 0
    %656 = vmatpush2.bf16.msra.mxu0 0
    %657 = vmatprep.subr.bf16.mxu0 0
    %658 = vmatpush2.bf16.msra.mxu0 0
    %659 = vmatprep.subr.bf16.mxu0 0
    %660 = vmatpush2.bf16.msra.mxu0 0
    %661 = vmatprep.subr.bf16.mxu0 0
    %662 = vmatpush2.bf16.msra.mxu0 0
    %663 = vmatprep.subr.bf16.mxu0 0
    %664 = vmatpush2.bf16.msra.mxu0 0
    %665 = vmatprep.mubr.bf16.mxu0 0
    %666 = vmatmul.mubr.bf16.gmra.mxu0 %v559
    %v667 = vpop.f32.mrf.mxu0
    %v668 = vadd.f32 %v583, %v667
    %v669 = vpop.f32.mrf.mxu0
    %v670 = vpop.f32.mrf.mxu0
    %v671 = vpop.f32.mrf.mxu0
    %672 = vdwg.mxu0
    %v673 = vadd.f32 %v443, %v668
    %v674 = vld [vmem:[%s7] sm:$0x1]
    %v676 = vlaneseq
    %v677 = vshrl.u32 %v676, 7
    %v678 = vsub.s32 0, %v677
    %v679 = vrot.slane %v674, %v678
    %v681 = vmul.f32 %v673, %v679
    %v682 = vld [vmem:[%s8] sm:$0x1]
    %v684 = vlaneseq
    %v685 = vshrl.u32 %v684, 7
    %v686 = vsub.s32 0, %v685
    %v687 = vrot.slane %v682, %v686
    %v689 = vadd.f32 %v681, %v687
    %v690 = vmax.f32 %v689, 0.0
    %v691 = vpack.c.bf16 %v690, %v690
    %v692 = vld [vmem:[#allocation10] sm:$0xf]
    %v693 = vld [vmem:[#allocation10 + $0x4] sm:$0xf]
    %v694 = vld [vmem:[#allocation10 + $0x8] sm:$0xf]
    %v695 = vld [vmem:[#allocation10 + $0xc] sm:$0xf]
    %v696 = vld [vmem:[#allocation10 + $0x10] sm:$0xf]
    %v697 = vld [vmem:[#allocation10 + $0x14] sm:$0xf]
    %v698 = vld [vmem:[#allocation10 + $0x18] sm:$0xf]
    %v699 = vld [vmem:[#allocation10 + $0x1c] sm:$0xf]
    %v700 = vld [vmem:[#allocation10 + $0x20] sm:$0xf]
    %v701 = vld [vmem:[#allocation10 + $0x24] sm:$0xf]
    %v702 = vld [vmem:[#allocation10 + $0x28] sm:$0xf]
    %v703 = vld [vmem:[#allocation10 + $0x2c] sm:$0xf]
    %v704 = vld [vmem:[#allocation10 + $0x30] sm:$0xf]
    %v705 = vld [vmem:[#allocation10 + $0x34] sm:$0xf]
    %v706 = vld [vmem:[#allocation10 + $0x38] sm:$0xf]
    %v707 = vld [vmem:[#allocation10 + $0x3c] sm:$0xf]
    %v708 = vld [vmem:[%s10] sm:$0x1]
    %v710 = vlaneseq
    %v711 = vshrl.u32 %v710, 7
    %v712 = vsub.s32 0, %v711
    %v713 = vrot.slane %v708, %v712
    %v731 = vunpack.c.l.b16 %v692
    %v732 = vunpack.c.l.b16 %v693
    %v733 = vunpack.c.l.b16 %v694
    %v734 = vunpack.c.l.b16 %v695
    %v735 = vunpack.c.l.b16 %v696
    %v736 = vunpack.c.l.b16 %v697
    %v737 = vunpack.c.l.b16 %v698
    %v738 = vunpack.c.l.b16 %v699
    %v739 = vunpack.c.l.b16 %v700
    %v740 = vunpack.c.l.b16 %v701
    %v741 = vunpack.c.l.b16 %v702
    %v742 = vunpack.c.l.b16 %v703
    %v743 = vunpack.c.l.b16 %v704
    %v744 = vunpack.c.l.b16 %v705
    %v745 = vunpack.c.l.b16 %v706
    %v746 = vunpack.c.l.b16 %v707
    %v747 = vpack.c.b16 %v732, %v731
    %v748 = vpack.c.b16 %v734, %v733
    %v749 = vpack.c.b16 %v736, %v735
    %v750 = vpack.c.b16 %v738, %v737
    %v751 = vpack.c.b16 %v740, %v739
    %v752 = vpack.c.b16 %v742, %v741
    %v753 = vpack.c.b16 %v744, %v743
    %v754 = vpack.c.b16 %v746, %v745
    %763 = vmatprep.subr.bf16.mxu0 0
    %764 = vmatpush1.bf16.msra.mxu0 %v754
    %765 = vmatprep.subr.bf16.mxu0 0
    %766 = vmatpush1.bf16.msra.mxu0 %v753
    %767 = vmatprep.subr.bf16.mxu0 0
    %768 = vmatpush1.bf16.msra.mxu0 %v752
    %769 = vmatprep.subr.bf16.mxu0 0
    %770 = vmatpush1.bf16.msra.mxu0 %v751
    %771 = vmatprep.subr.bf16.mxu0 0
    %772 = vmatpush1.bf16.msra.mxu0 %v750
    %773 = vmatprep.subr.bf16.mxu0 0
    %774 = vmatpush1.bf16.msra.mxu0 %v749
    %775 = vmatprep.subr.bf16.mxu0 0
    %776 = vmatpush1.bf16.msra.mxu0 %v748
    %777 = vmatprep.subr.bf16.mxu0 0
    %778 = vmatpush1.bf16.msra.mxu0 %v747
    %779 = vmatprep.subr.bf16.mxu0 0
    %780 = vmatpush2.bf16.msra.mxu0 0
    %781 = vmatprep.subr.bf16.mxu0 0
    %782 = vmatpush2.bf16.msra.mxu0 0
    %783 = vmatprep.subr.bf16.mxu0 0
    %784 = vmatpush2.bf16.msra.mxu0 0
    %785 = vmatprep.subr.bf16.mxu0 0
    %786 = vmatpush2.bf16.msra.mxu0 0
    %787 = vmatprep.subr.bf16.mxu0 0
    %788 = vmatpush2.bf16.msra.mxu0 0
    %789 = vmatprep.subr.bf16.mxu0 0
    %790 = vmatpush2.bf16.msra.mxu0 0
    %791 = vmatprep.subr.bf16.mxu0 0
    %792 = vmatpush2.bf16.msra.mxu0 0
    %793 = vmatprep.subr.bf16.mxu0 0
    %794 = vmatpush2.bf16.msra.mxu0 0
    %795 = vmatprep.mubr.bf16.mxu0 0
    %796 = vmatmul.mubr.bf16.gmra.mxu0 %v691
    %v797 = vpop.f32.mrf.mxu0
    %v798 = vadd.f32 %v713, %v797
    %v799 = vpop.f32.mrf.mxu0
    %v800 = vpop.f32.mrf.mxu0
    %v801 = vpop.f32.mrf.mxu0
    %802 = vdwg.mxu0
    %803 = vst [vmem:[#allocation11] sm:$0xff] %v798
    // Predicated region
    $region66: #{tpu_custom_call.1} parent=1 // pred_check
      _
    $region67: #{tpu_custom_call.1} parent=1 // pred_check_branch
      %805 = sbr.rel (0) target = $region69
    $region68: #{tpu_custom_call.1} parent=1 // pred_region
      %s807 = ssub.s32 128, 128
      %808 = vsyncadd [#allocation4], %s807
      %s810 = sshll.u32 [#allocation11], 4
      %s811 = int_to_ptr.vmem [resolvable:$true] %s810
      %813 = dma.vmem_to_hbm [thread:$0]  %s811, 128, %s11, [#allocation4]
    $region69: #{tpu_custom_call.1} parent=1 // pred_fallthru
      _
    // Predicated region
    $region70: #{tpu_custom_call.1} parent=1 // pred_check
      _
    $region71: #{tpu_custom_call.1} parent=1 // pred_check_branch
      %815 = sbr.rel (0) target = $region73
    $region72: #{tpu_custom_call.1} parent=1 // pred_region
      %816 = dma.done [#allocation4], 128
    $region73: #{tpu_custom_call.1} parent=1 // pred_fallthru
      _
    %817 = vsyncpa [#allocation3], 1
    %818 = vsyncpa [#allocation6], 1
    %819 = vsyncpa [#allocation9], 1
    %820 = vsyncpa [#allocation4], 1

</llo_original>
